<compile_context>
chip_gen: v6e
topology: v6e:2x2x1
jax: 0.10.0
libtpu: 0.0.40
codegen_flags: <defaults>
</compile_context>

<pallas_src>
import functools

import jax
import jax.numpy as jnp
from jax.experimental import pallas as pl
from jax.experimental.pallas import tpu as pltpu


# ---------------------------------------------------------------------------
# Chip-aware parameters
# ---------------------------------------------------------------------------
def _chip_info():
    """Return (n_tensorcores, vmem_limit_cap_bytes) from the device kind.

    v5e / v6e : 1 TC, 128 MiB VMEM -> big cap, never shrink tiles for megacore.
    v4 / v5p  : 2 TC (megacore), 128 MiB VMEM.
    unknown/v7x: conservative default (2 TCs, 64 MiB physical VMEM).
    """
    kind = ""
    try:
        kind = jax.devices()[0].device_kind.lower()
    except Exception:
        pass
    if ("v5 lite" in kind) or ("v5e" in kind) or ("v6" in kind):
        return 1, (100 << 20)
    if ("v4" in kind) or ("v5p" in kind) or ("v5" in kind):
        return 2, (100 << 20)
    return 2, (48 << 20)


def _round_up(x, m):
    return ((x + m - 1) // m) * m


# ---------------------------------------------------------------------------
# Fused implicit-GEMM kernel (stride == 1): no im2col materialization in HBM.
# ---------------------------------------------------------------------------
def _fused_conv_kernel(x_ref, w_ref, b_ref, o_ref, *, kh, kw, w_pad, msp, c_out):
    # x_ref: (1, C_in, Lp)       relu'd, spatially padded, flattened sample
    # w_ref: (kh*kw, C_out, C_in)  w_ref[i*kw+j] is the (C_out, C_in) tap matrix
    # b_ref: (C_out, 1) f32      bias column (zeros if bias=False)
    # o_ref: (1, C_out, msp)     msp = OH*W_pad; columns ow >= OW are garbage
    #                            and get sliced off in the glue.
    acc = jnp.broadcast_to(b_ref[...], (c_out, msp))          # f32 accumulator
    for r in range(kh * kw):                                   # static, unrolled
        i, j = divmod(r, kw)
        d = i * w_pad + j                                      # flattened tap offset
        xs = x_ref[0, :, d:d + msp]                            # (C_in, msp) shifted view
        acc = acc + jnp.dot(w_ref[r], xs, preferred_element_type=jnp.float32)
    o_ref[0] = acc.astype(o_ref.dtype)


def _fused_vmem_bytes(c_in, lp, c_out, msp, khkw, in_item, out_item):
    est = 2 * c_in * lp * in_item             # x sample block, double-buffered
    est += 2 * khkw * c_out * c_in * in_item  # weight taps
    est += 2 * c_out * 4                      # bias
    est += 2 * c_out * msp * out_item         # output block
    est += c_out * msp * 4                    # f32 accumulator (values)
    est += 2 * c_in * msp * in_item           # shifted-slice temporaries
    return int(est * 1.5) + (8 << 20)


def _fused_conv_call(xf, w_taps, bias_col, out_dtype, *, kh, kw, w_pad, msp,
                     vmem_limit):
    N, C_in, Lp = xf.shape
    khkw, C_out, _ = w_taps.shape
    kernel = functools.partial(_fused_conv_kernel, kh=kh, kw=kw,
                               w_pad=w_pad, msp=msp, c_out=C_out)
    return pl.pallas_call(
        kernel,
        out_shape=jax.ShapeDtypeStruct((N, C_out, msp), out_dtype),
        grid_spec=pltpu.PrefetchScalarGridSpec(
            num_scalar_prefetch=0,
            grid=(N,),
            in_specs=[
                pl.BlockSpec((1, C_in, Lp), lambda n: (n, 0, 0)),
                pl.BlockSpec((khkw, C_out, C_in), lambda n: (0, 0, 0)),
                pl.BlockSpec((C_out, 1), lambda n: (0, 0)),
            ],
            out_specs=pl.BlockSpec((1, C_out, msp), lambda n: (n, 0, 0)),
        ),
        compiler_params=pltpu.CompilerParams(
            dimension_semantics=("parallel",),
            vmem_limit_bytes=vmem_limit,
        ),
    )(xf, w_taps, bias_col)


# ---------------------------------------------------------------------------
# Fallback: im2col + tiled GEMM (stride != 1 or oversized sample).
#   out[C_out, tm] = W[C_out, K] @ patches[K, tm]   (lane-dense output tiles)
# ---------------------------------------------------------------------------
def _gemm_kernel_acc(p_ref, w_ref, b_ref, o_ref, acc_ref):
    k = pl.program_id(2)

    @pl.when(k == 0)
    def _init():
        acc_ref[...] = jnp.broadcast_to(b_ref[...], acc_ref.shape)  # bias folded in

    acc_ref[...] += jnp.dot(w_ref[...], p_ref[0],
                            preferred_element_type=jnp.float32)

    @pl.when(k == pl.num_programs(2) - 1)
    def _finalize():
        o_ref[0] = acc_ref[...].astype(o_ref.dtype)


def _gemm_kernel_single(p_ref, w_ref, b_ref, o_ref):
    # n_k == 1 specialization: no scratch, no pl.when, single MXU dot + bias.
    o_ref[0] = (jnp.dot(w_ref[...], p_ref[0], preferred_element_type=jnp.float32)
                + b_ref[...]).astype(o_ref.dtype)


def _choose_tiles(N, Ms, K, n_cores, big_vmem):
    # tm: lane dim of patch/output tiles.  Bigger tiles amortize the ~0.35 us
    # per-grid-step overhead and improve DMA efficiency.  Only shrink to feed
    # a real second TensorCore (v4/v5p/v7x megacore) -- never on v5e/v6e.
    tm_cap = 1024 if big_vmem else 512
    tm = min(tm_cap, _round_up(Ms, 128))
    if n_cores > 1:
        while tm > 128 and N * pl.cdiv(Ms, tm) < 2 * n_cores:
            tm -= 128
    # tk: contraction tile; multiple of 128 also covers bf16/fp8 sublane packing.
    tk = K if K <= 2048 else 512
    return tm, tk


def _gemm_vmem_bytes(tm, tk, c_out, in_item, out_item, cap):
    est = 2 * tm * tk * in_item       # patch tile, double-buffered
    est += 2 * c_out * tk * in_item   # weight block
    est += 2 * c_out * 4              # bias
    est += 2 * c_out * tm * out_item  # output block
    est += c_out * tm * 4             # accumulator scratch
    est = int(est * 1.5) + (4 << 20)
    return int(min(max(est, 16 << 20), cap))


def _unfold_nchw(x, kh, kw, sh, sw, ph, pw):
    # torch F.unfold feature order: C outer, then kh, then kw.
    N, C, H, W = x.shape
    OH = (H + 2 * ph - kh) // sh + 1
    OW = (W + 2 * pw - kw) // sw + 1
    xp = jnp.pad(x, ((0, 0), (0, 0), (ph, ph), (pw, pw)))
    cols = []
    for i in range(kh):
        for j in range(kw):
            cols.append(
                xp[:, :, i: i + sh * (OH - 1) + 1: sh,
                         j: j + sw * (OW - 1) + 1: sw])      # (N, C, OH, OW)
    cols = jnp.stack(cols, axis=2)                           # (N, C, KH*KW, OH, OW)
    cols = cols.reshape(N, C * kh * kw, OH * OW)             # (N, K, Ms)
    return cols, OH, OW


def _relu_conv_gemm(patches, w2d, bias_col, out_dtype, *, tm, tk, vmem_cap):
    # patches: (N, K, Ms); w2d: (C_out, K); bias_col: (C_out, 1) f32
    N, K, Ms = patches.shape
    C_out = w2d.shape[0]

    Ms_pad = _round_up(Ms, tm)
    K_pad = _round_up(K, tk)
    # TODO(synk): pad x (channels/spatial) upstream of the unfold instead of
    # padding the kh*kw-inflated patch matrix; only hit when Ms/K are unaligned.
    if Ms_pad != Ms or K_pad != K:
        patches = jnp.pad(patches, ((0, 0), (0, K_pad - K), (0, Ms_pad - Ms)))
    if K_pad != K:
        w2d = jnp.pad(w2d, ((0, 0), (0, K_pad - K)))

    n_m = Ms_pad // tm
    n_k = K_pad // tk
    in_item = patches.dtype.itemsize
    out_item = jnp.dtype(out_dtype).itemsize
    vmem_limit = _gemm_vmem_bytes(tm, K_pad if n_k == 1 else tk, C_out,
                                  in_item, out_item, vmem_cap)

    if n_k == 1:
        out = pl.pallas_call(
            _gemm_kernel_single,
            out_shape=jax.ShapeDtypeStruct((N, C_out, Ms_pad), out_dtype),
            grid_spec=pltpu.PrefetchScalarGridSpec(
                num_scalar_prefetch=0,
                grid=(N, n_m),
                in_specs=[
                    pl.BlockSpec((1, K_pad, tm), lambda n, m: (n, 0, m)),
                    pl.BlockSpec((C_out, K_pad), lambda n, m: (0, 0)),
                    pl.BlockSpec((C_out, 1), lambda n, m: (0, 0)),
                ],
                out_specs=pl.BlockSpec((1, C_out, tm), lambda n, m: (n, 0, m)),
            ),
            compiler_params=pltpu.CompilerParams(
                dimension_semantics=("parallel", "parallel"),
                vmem_limit_bytes=vmem_limit,
            ),
        )(patches, w2d, bias_col)
    else:
        out = pl.pallas_call(
            _gemm_kernel_acc,
            out_shape=jax.ShapeDtypeStruct((N, C_out, Ms_pad), out_dtype),
            grid_spec=pltpu.PrefetchScalarGridSpec(
                num_scalar_prefetch=0,
                grid=(N, n_m, n_k),
                in_specs=[
                    pl.BlockSpec((1, tk, tm), lambda n, m, k: (n, k, m)),
                    pl.BlockSpec((C_out, tk), lambda n, m, k: (0, k)),
                    pl.BlockSpec((C_out, 1), lambda n, m, k: (0, 0)),
                ],
                out_specs=pl.BlockSpec((1, C_out, tm), lambda n, m, k: (n, 0, m)),
                scratch_shapes=[pltpu.VMEM((C_out, tm), jnp.float32)],
            ),
            compiler_params=pltpu.CompilerParams(
                dimension_semantics=("parallel", "parallel", "arbitrary"),
                vmem_limit_bytes=vmem_limit,
            ),
        )(patches, w2d, bias_col)
    return out[:, :, :Ms]


# ---------------------------------------------------------------------------
# Relu_Conv forward
# ---------------------------------------------------------------------------
def relu_conv_forward(x, weight, bias, *, stride, padding, compute_dtype=None):
    """Forward of Relu_Conv: conv2d(relu(x)) (+ bias).

    x: (N, C_in, H, W); weight: (C_out, C_in, KH, KW); bias: (C_out,) or None.
    compute_dtype: MXU operand dtype.  bf16 is recommended on v5e, v6e and v7x
    (all of their MXUs consume bf16 natively; accumulation stays f32).
    Output keeps x.dtype.
    """
    N, C_in, H, W = x.shape
    C_out, _, kh, kw = weight.shape
    sh, sw = stride
    ph, pw = padding
    cdt = jnp.dtype(compute_dtype) if compute_dtype is not None else x.dtype
    n_cores, vmem_cap = _chip_info()

    # ReLU once (and downcast once) BEFORE padding/patching: relu(0)=0 and the
    # spatial pad value is 0, so this equals relu applied to every patch element.
    x_act = jnp.maximum(x, 0).astype(cdt)
    bias_col = (jnp.zeros((C_out, 1), jnp.float32) if bias is None
                else bias.reshape(C_out, 1).astype(jnp.float32))

    OH = (H + 2 * ph - kh) // sh + 1
    OW = (W + 2 * pw - kw) // sw + 1

    # ---- Fused implicit-GEMM path (stride 1): no im2col HBM round-trip ----
    if sh == 1 and sw == 1:
        H_pad, W_pad = H + 2 * ph, W + 2 * pw
        extra = 1 if kw > 1 else 0            # one spare zero row so the last
        Lp = (H_pad + extra) * W_pad          # tap's shifted slice stays in-bounds
        msp = OH * W_pad                      # output positions on padded-W grid
        est = _fused_vmem_bytes(C_in, Lp, C_out, msp, kh * kw,
                                jnp.dtype(cdt).itemsize, x.dtype.itemsize)
        if est <= vmem_cap:
            xp = jnp.pad(x_act, ((0, 0), (0, 0), (ph, ph + extra), (pw, pw)))
            xf = xp.reshape(N, C_in, Lp)      # contiguous -> free reshape
            w_taps = (jnp.transpose(weight, (2, 3, 0, 1))
                      .reshape(kh * kw, C_out, C_in).astype(cdt))
            out_flat = _fused_conv_call(
                xf, w_taps, bias_col, x.dtype, kh=kh, kw=kw, w_pad=W_pad,
                msp=msp, vmem_limit=int(min(max(est, 16 << 20), vmem_cap)))
            # (N, C_out, OH*W_pad) -> (N, C_out, OH, W_pad) is a free reshape;
            # dropping the W_pad-OW garbage columns is one cheap output copy.
            return out_flat.reshape(N, C_out, OH, W_pad)[:, :, :, :OW]

    # ---- Fallback: im2col + tiled GEMM ----
    patches, OH, OW = _unfold_nchw(x_act, kh, kw, sh, sw, ph, pw)  # (N, K, Ms)
    K = C_in * kh * kw
    w2d = weight.reshape(C_out, K).astype(cdt)
    tm, tk = _choose_tiles(N, OH * OW, K, n_cores, vmem_cap >= (96 << 20))
    out = _relu_conv_gemm(patches, w2d, bias_col, x.dtype,
                          tm=tm, tk=tk, vmem_cap=vmem_cap)
    return out.reshape(N, C_out, OH, OW)


# ---------------------------------------------------------------------------
# Deterministic parameter init (kaiming_normal, mode='fan_out', relu gain)
# ---------------------------------------------------------------------------
def init_relu_conv_params(key, inplanes, planes, kernel_size, use_bias):
    kh, kw = kernel_size
    wkey, bkey = jax.random.split(key)
    fan_out = planes * kh * kw
    std = (2.0 / fan_out) ** 0.5
    weight = std * jax.random.normal(wkey, (planes, inplanes, kh, kw), jnp.float32)
    if use_bias:
        fan_in = inplanes * kh * kw
        bound = 1.0 / (fan_in ** 0.5)
        bias = jax.random.uniform(bkey, (planes,), jnp.float32, -bound, bound)
    else:
        bias = None
    return weight, bias


if __name__ == "__main__":
    # module config: Relu_Conv(inplanes=4, planes=8, kernel_size=3, stride=1,
    #                          padding=1, bias=True)
    inplanes, planes = 4, 8
    kernel_size = (3, 3)

    key = jax.random.PRNGKey(0)
    xkey, pkey = jax.random.split(key)
    x = jax.random.normal(xkey, (2, inplanes, 16, 16), jnp.float32)
    weight, bias = init_relu_conv_params(pkey, inplanes, planes, kernel_size, True)

    def reference(x, weight, bias, stride, padding):
        xr = jnp.maximum(x, 0.0)
        y = jax.lax.conv_general_dilated(
            xr, weight, window_strides=stride, padding=[padding, padding],
            dimension_numbers=("NCHW", "OIHW", "NCHW"))
        return y + bias.reshape(1, -1, 1, 1)

    # 1) stride 1, padding 1 -> fused implicit-GEMM path, f32 compute.
    y_ref = reference(x, weight, bias, (1, 1), (1, 1))
    fwd = jax.jit(functools.partial(relu_conv_forward,
                                    stride=(1, 1), padding=(1, 1)))
    y = fwd(x, weight, bias)
    jax.block_until_ready(y)
    assert y.shape == (2, planes, 16, 16)
    assert jnp.allclose(y, y_ref, atol=5e-4, rtol=5e-4)

    # 2) bf16 compute path (recommended on v5e/v6e/v7x: halves activation bytes).
    fwd_bf16 = jax.jit(functools.partial(relu_conv_forward, stride=(1, 1),
                                         padding=(1, 1),
                                         compute_dtype=jnp.bfloat16))
    y_bf16 = fwd_bf16(x, weight, bias)
    jax.block_until_ready(y_bf16)
    assert y_bf16.shape == (2, planes, 16, 16)
    assert jnp.allclose(y_bf16, y_ref, atol=5e-2, rtol=5e-2)

    # 3) stride 2 -> im2col + tiled-GEMM fallback path (n_k == 1 specialization).
    y2_ref = reference(x, weight, bias, (2, 2), (1, 1))
    fwd_s2 = jax.jit(functools.partial(relu_conv_forward,
                                       stride=(2, 2), padding=(1, 1)))
    y2 = fwd_s2(x, weight, bias)
    jax.block_until_ready(y2)
    assert y2.shape == (2, planes, 8, 8)
    assert jnp.allclose(y2, y2_ref, atol=5e-4, rtol=5e-4)

    print("KERNEL_OK")
</pallas_src>

<mosaic_0001>
module attributes {stable_mosaic.version = 11 : i64} {
  func.func @_fused_conv_kernel(%arg0: i32, %arg1: memref<1x4x342xf32, #tpu.memory_space<vmem>>, %arg2: memref<9x8x4xf32, #tpu.memory_space<vmem>>, %arg3: memref<8x1xf32, #tpu.memory_space<vmem>>, %arg4: memref<1x8x288xf32, #tpu.memory_space<vmem>>) attributes {dimension_semantics = [#tpu.dimension_semantics<parallel>], iteration_bounds = array<i64: 2>, scalar_prefetch = 0 : i64, scratch_operands = 0 : i64, tpu.core_type = #tpu.core_type<tc>, window_params = [{transform_indices = @transform_0, window_bounds = array<i64: 1, 4, 342>}, {pipeline_mode = #tpu.pipeline_mode<synchronous>, transform_indices = @transform_1, window_bounds = array<i64: 9, 8, 4>}, {pipeline_mode = #tpu.pipeline_mode<synchronous>, transform_indices = @transform_2, window_bounds = array<i64: 8, 1>}, {transform_indices = @transform_3, window_bounds = array<i64: 1, 8, 288>}]} {
    %c0 = arith.constant 0 : index
    %c0_0 = arith.constant 0 : index
    %0 = vector.load %arg3[%c0, %c0_0] : memref<8x1xf32, #tpu.memory_space<vmem>>, vector<8x1xf32>
    %1 = vector.shape_cast %0 : vector<8x1xf32> to vector<8x1xf32>
    %2 = vector.broadcast %1 : vector<8x1xf32> to vector<8x288xf32>
    %c0_1 = arith.constant 0 : index
    %c0_2 = arith.constant 0 : index
    %c0_3 = arith.constant 0 : index
    %3 = vector.load %arg1[%c0_1, %c0_2, %c0_3] : memref<1x4x342xf32, #tpu.memory_space<vmem>>, vector<1x4x288xf32>
    %4 = vector.shape_cast %3 : vector<1x4x288xf32> to vector<4x288xf32>
    %c0_4 = arith.constant 0 : index
    %c0_5 = arith.constant 0 : index
    %c0_6 = arith.constant 0 : index
    %5 = vector.load %arg2[%c0_4, %c0_5, %c0_6] : memref<9x8x4xf32, #tpu.memory_space<vmem>>, vector<1x8x4xf32>
    %6 = vector.shape_cast %5 : vector<1x8x4xf32> to vector<8x4xf32>
    %cst = arith.constant dense<0.000000e+00> : vector<8x288xf32>
    %7 = tpu.matmul %6, %4, %cst {dimension_numbers = #tpu.dot_dimension_numbers<[1], [0], [0], [1], [0, 0, 1, 1], [], []>} : vector<8x4xf32>, vector<4x288xf32>, vector<8x288xf32> -> vector<8x288xf32>
    %8 = arith.addf %2, %7 : vector<8x288xf32>
    %c0_7 = arith.constant 0 : index
    %c0_8 = arith.constant 0 : index
    %c1 = arith.constant 1 : index
    %9 = vector.load %arg1[%c0_7, %c0_8, %c1] : memref<1x4x342xf32, #tpu.memory_space<vmem>>, vector<1x4x288xf32>
    %10 = vector.shape_cast %9 : vector<1x4x288xf32> to vector<4x288xf32>
    %c1_9 = arith.constant 1 : index
    %c0_10 = arith.constant 0 : index
    %c0_11 = arith.constant 0 : index
    %11 = vector.load %arg2[%c1_9, %c0_10, %c0_11] : memref<9x8x4xf32, #tpu.memory_space<vmem>>, vector<1x8x4xf32>
    %12 = vector.shape_cast %11 : vector<1x8x4xf32> to vector<8x4xf32>
    %cst_12 = arith.constant dense<0.000000e+00> : vector<8x288xf32>
    %13 = tpu.matmul %12, %10, %cst_12 {dimension_numbers = #tpu.dot_dimension_numbers<[1], [0], [0], [1], [0, 0, 1, 1], [], []>} : vector<8x4xf32>, vector<4x288xf32>, vector<8x288xf32> -> vector<8x288xf32>
    %14 = arith.addf %8, %13 : vector<8x288xf32>
    %c0_13 = arith.constant 0 : index
    %c0_14 = arith.constant 0 : index
    %c2 = arith.constant 2 : index
    %15 = vector.load %arg1[%c0_13, %c0_14, %c2] : memref<1x4x342xf32, #tpu.memory_space<vmem>>, vector<1x4x288xf32>
    %16 = vector.shape_cast %15 : vector<1x4x288xf32> to vector<4x288xf32>
    %c2_15 = arith.constant 2 : index
    %c0_16 = arith.constant 0 : index
    %c0_17 = arith.constant 0 : index
    %17 = vector.load %arg2[%c2_15, %c0_16, %c0_17] : memref<9x8x4xf32, #tpu.memory_space<vmem>>, vector<1x8x4xf32>
    %18 = vector.shape_cast %17 : vector<1x8x4xf32> to vector<8x4xf32>
    %cst_18 = arith.constant dense<0.000000e+00> : vector<8x288xf32>
    %19 = tpu.matmul %18, %16, %cst_18 {dimension_numbers = #tpu.dot_dimension_numbers<[1], [0], [0], [1], [0, 0, 1, 1], [], []>} : vector<8x4xf32>, vector<4x288xf32>, vector<8x288xf32> -> vector<8x288xf32>
    %20 = arith.addf %14, %19 : vector<8x288xf32>
    %c0_19 = arith.constant 0 : index
    %c0_20 = arith.constant 0 : index
    %c18 = arith.constant 18 : index
    %21 = vector.load %arg1[%c0_19, %c0_20, %c18] : memref<1x4x342xf32, #tpu.memory_space<vmem>>, vector<1x4x288xf32>
    %22 = vector.shape_cast %21 : vector<1x4x288xf32> to vector<4x288xf32>
    %c3 = arith.constant 3 : index
    %c0_21 = arith.constant 0 : index
    %c0_22 = arith.constant 0 : index
    %23 = vector.load %arg2[%c3, %c0_21, %c0_22] : memref<9x8x4xf32, #tpu.memory_space<vmem>>, vector<1x8x4xf32>
    %24 = vector.shape_cast %23 : vector<1x8x4xf32> to vector<8x4xf32>
    %cst_23 = arith.constant dense<0.000000e+00> : vector<8x288xf32>
    %25 = tpu.matmul %24, %22, %cst_23 {dimension_numbers = #tpu.dot_dimension_numbers<[1], [0], [0], [1], [0, 0, 1, 1], [], []>} : vector<8x4xf32>, vector<4x288xf32>, vector<8x288xf32> -> vector<8x288xf32>
    %26 = arith.addf %20, %25 : vector<8x288xf32>
    %c0_24 = arith.constant 0 : index
    %c0_25 = arith.constant 0 : index
    %c19 = arith.constant 19 : index
    %27 = vector.load %arg1[%c0_24, %c0_25, %c19] : memref<1x4x342xf32, #tpu.memory_space<vmem>>, vector<1x4x288xf32>
    %28 = vector.shape_cast %27 : vector<1x4x288xf32> to vector<4x288xf32>
    %c4 = arith.constant 4 : index
    %c0_26 = arith.constant 0 : index
    %c0_27 = arith.constant 0 : index
    %29 = vector.load %arg2[%c4, %c0_26, %c0_27] : memref<9x8x4xf32, #tpu.memory_space<vmem>>, vector<1x8x4xf32>
    %30 = vector.shape_cast %29 : vector<1x8x4xf32> to vector<8x4xf32>
    %cst_28 = arith.constant dense<0.000000e+00> : vector<8x288xf32>
    %31 = tpu.matmul %30, %28, %cst_28 {dimension_numbers = #tpu.dot_dimension_numbers<[1], [0], [0], [1], [0, 0, 1, 1], [], []>} : vector<8x4xf32>, vector<4x288xf32>, vector<8x288xf32> -> vector<8x288xf32>
    %32 = arith.addf %26, %31 : vector<8x288xf32>
    %c0_29 = arith.constant 0 : index
    %c0_30 = arith.constant 0 : index
    %c20 = arith.constant 20 : index
    %33 = vector.load %arg1[%c0_29, %c0_30, %c20] : memref<1x4x342xf32, #tpu.memory_space<vmem>>, vector<1x4x288xf32>
    %34 = vector.shape_cast %33 : vector<1x4x288xf32> to vector<4x288xf32>
    %c5 = arith.constant 5 : index
    %c0_31 = arith.constant 0 : index
    %c0_32 = arith.constant 0 : index
    %35 = vector.load %arg2[%c5, %c0_31, %c0_32] : memref<9x8x4xf32, #tpu.memory_space<vmem>>, vector<1x8x4xf32>
    %36 = vector.shape_cast %35 : vector<1x8x4xf32> to vector<8x4xf32>
    %cst_33 = arith.constant dense<0.000000e+00> : vector<8x288xf32>
    %37 = tpu.matmul %36, %34, %cst_33 {dimension_numbers = #tpu.dot_dimension_numbers<[1], [0], [0], [1], [0, 0, 1, 1], [], []>} : vector<8x4xf32>, vector<4x288xf32>, vector<8x288xf32> -> vector<8x288xf32>
    %38 = arith.addf %32, %37 : vector<8x288xf32>
    %c0_34 = arith.constant 0 : index
    %c0_35 = arith.constant 0 : index
    %c36 = arith.constant 36 : index
    %39 = vector.load %arg1[%c0_34, %c0_35, %c36] : memref<1x4x342xf32, #tpu.memory_space<vmem>>, vector<1x4x288xf32>
    %40 = vector.shape_cast %39 : vector<1x4x288xf32> to vector<4x288xf32>
    %c6 = arith.constant 6 : index
    %c0_36 = arith.constant 0 : index
    %c0_37 = arith.constant 0 : index
    %41 = vector.load %arg2[%c6, %c0_36, %c0_37] : memref<9x8x4xf32, #tpu.memory_space<vmem>>, vector<1x8x4xf32>
    %42 = vector.shape_cast %41 : vector<1x8x4xf32> to vector<8x4xf32>
    %cst_38 = arith.constant dense<0.000000e+00> : vector<8x288xf32>
    %43 = tpu.matmul %42, %40, %cst_38 {dimension_numbers = #tpu.dot_dimension_numbers<[1], [0], [0], [1], [0, 0, 1, 1], [], []>} : vector<8x4xf32>, vector<4x288xf32>, vector<8x288xf32> -> vector<8x288xf32>
    %44 = arith.addf %38, %43 : vector<8x288xf32>
    %c0_39 = arith.constant 0 : index
    %c0_40 = arith.constant 0 : index
    %c37 = arith.constant 37 : index
    %45 = vector.load %arg1[%c0_39, %c0_40, %c37] : memref<1x4x342xf32, #tpu.memory_space<vmem>>, vector<1x4x288xf32>
    %46 = vector.shape_cast %45 : vector<1x4x288xf32> to vector<4x288xf32>
    %c7 = arith.constant 7 : index
    %c0_41 = arith.constant 0 : index
    %c0_42 = arith.constant 0 : index
    %47 = vector.load %arg2[%c7, %c0_41, %c0_42] : memref<9x8x4xf32, #tpu.memory_space<vmem>>, vector<1x8x4xf32>
    %48 = vector.shape_cast %47 : vector<1x8x4xf32> to vector<8x4xf32>
    %cst_43 = arith.constant dense<0.000000e+00> : vector<8x288xf32>
    %49 = tpu.matmul %48, %46, %cst_43 {dimension_numbers = #tpu.dot_dimension_numbers<[1], [0], [0], [1], [0, 0, 1, 1], [], []>} : vector<8x4xf32>, vector<4x288xf32>, vector<8x288xf32> -> vector<8x288xf32>
    %50 = arith.addf %44, %49 : vector<8x288xf32>
    %c0_44 = arith.constant 0 : index
    %c0_45 = arith.constant 0 : index
    %c38 = arith.constant 38 : index
    %51 = vector.load %arg1[%c0_44, %c0_45, %c38] : memref<1x4x342xf32, #tpu.memory_space<vmem>>, vector<1x4x288xf32>
    %52 = vector.shape_cast %51 : vector<1x4x288xf32> to vector<4x288xf32>
    %c8 = arith.constant 8 : index
    %c0_46 = arith.constant 0 : index
    %c0_47 = arith.constant 0 : index
    %53 = vector.load %arg2[%c8, %c0_46, %c0_47] : memref<9x8x4xf32, #tpu.memory_space<vmem>>, vector<1x8x4xf32>
    %54 = vector.shape_cast %53 : vector<1x8x4xf32> to vector<8x4xf32>
    %cst_48 = arith.constant dense<0.000000e+00> : vector<8x288xf32>
    %55 = tpu.matmul %54, %52, %cst_48 {dimension_numbers = #tpu.dot_dimension_numbers<[1], [0], [0], [1], [0, 0, 1, 1], [], []>} : vector<8x4xf32>, vector<4x288xf32>, vector<8x288xf32> -> vector<8x288xf32>
    %56 = arith.addf %50, %55 : vector<8x288xf32>
    %c0_49 = arith.constant 0 : index
    %c0_50 = arith.constant 0 : index
    %c0_51 = arith.constant 0 : index
    %57 = vector.load %arg4[%c0_49, %c0_50, %c0_51] : memref<1x8x288xf32, #tpu.memory_space<vmem>>, vector<1x8x288xf32>
    %58 = vector.shape_cast %57 : vector<1x8x288xf32> to vector<8x288xf32>
    %59 = vector.shape_cast %56 : vector<8x288xf32> to vector<1x8x288xf32>
    tpu.vector_store %arg4[%c0_49, %c0_50, %c0_51], %59 {strides = array<i32>} : memref<1x8x288xf32, #tpu.memory_space<vmem>>, vector<1x8x288xf32>,
    return
  }
  func.func @transform_0(%arg0: i32) -> (i32, i32, i32) {
    %c0_i32 = arith.constant 0 : i32
    %c0_i32_0 = arith.constant 0 : i32
    %c0_i32_1 = arith.constant 0 : i32
    return %arg0, %c0_i32, %c0_i32_0 : i32, i32, i32
  }
  func.func @transform_1(%arg0: i32) -> (i32, i32, i32) {
    %c0_i32 = arith.constant 0 : i32
    %c0_i32_0 = arith.constant 0 : i32
    %c0_i32_1 = arith.constant 0 : i32
    %c0_i32_2 = arith.constant 0 : i32
    return %c0_i32, %c0_i32_0, %c0_i32_1 : i32, i32, i32
  }
  func.func @transform_2(%arg0: i32) -> (i32, i32) {
    %c0_i32 = arith.constant 0 : i32
    %c0_i32_0 = arith.constant 0 : i32
    %c0_i32_1 = arith.constant 0 : i32
    return %c0_i32, %c0_i32_0 : i32, i32
  }
  func.func @transform_3(%arg0: i32) -> (i32, i32, i32) {
    %c0_i32 = arith.constant 0 : i32
    %c0_i32_0 = arith.constant 0 : i32
    %c0_i32_1 = arith.constant 0 : i32
    return %arg0, %c0_i32, %c0_i32_0 : i32, i32, i32
  }
}

</mosaic_0001>

<llo_original>
// kernel: relu_conv_forward.1
$region0: #{relu_conv_forward.1}
  #allocation0 [shape = 'u32[]', space=smem, size = 0x4, offset = 0x4, fixed_abs, tag = 'smem constant byte address 0x4 - core index']
  #allocation1 [shape = 'u32[144,128]{1,0:T(1,128)}', space=vmem, size = 0x12000, scoped, tag = 'internal scratch']
  %s0 = inlined_call_operand.vmem [shape: f32[2,4,342], index: 0, kind: input, shape index: {}]
  %s1 = inlined_call_operand.vmem [shape: f32[9,8,4], index: 1, kind: input, shape index: {}]
  %s2 = inlined_call_operand.vmem [shape: f32[8,1], index: 2, kind: input, shape index: {}]
  %s3 = inlined_call_operand.vmem [shape: f32[2,8,288], index: 3, kind: output, shape index: {}]
  %s4 = sld [smem:[#allocation0]]
  $region45: #{relu_conv_forward.1} parent=0
    _
  %s6 = ssub.s32 1, %s4
  %s7 = scalar_select 0, %s6, %s4
  loop: start=0, step=1, limit=4
  $region2: #{relu_conv_forward.1} parent=0 // loop_pre_header
    _
  $region3: #{relu_conv_forward.1} parent=0 // loop_header
    %s9 = sphi 0, %s13
    %p10 = scmp.ge.s32.totalorder %s9, 4
    %s19 = sphi 0, %s21
    %s22 = sphi 0, %s19
    %s23 = sphi 0, %s22
    %s39 = sphi 0, %s23
    %s43 = sphi 0, %s43
    %s45 = sphi 0, %s43
    %s46 = sphi 0, %s45
    %s60 = sphi 0, %s46
    %s64 = sphi 0, %s64
    %s66 = sphi 0, %s64
    %s67 = sphi 0, %s66
    %s81 = sphi 0, %s67
    %s87 = sphi 0, %s89
    %s90 = sphi 0, %s87
    %s91 = sphi 0, %s90
    %s107 = sphi 0, %s91
  $region4: #{relu_conv_forward.1} parent=0 // loop_header_branch
    %12 = sbr.rel (%p10) target = $region8
  $region5: #{relu_conv_forward.1} parent=0 // loop_body
    %s14 = ssub.s32 %s9, 1
    %s15 = ssub.s32 %s9, 2
    %s16 = sadd.s32 %s9, 1
    %s17 = ssub.s32 %s9, %s16
    %p18 = scmp.eq.s32.totalorder %s17, 0
    %s20 = sadd.s32 %s19, 1
    %s21 = scalar_select %p18, %s19, %s20
    %p24 = pneg %p18
    %p25 = scmp.eq.s32.totalorder %s9, 1
    %p26 = por %p24, %p25
    %p27 = scmp.ne.s32.totalorder %s19, %s22
    %p28 = scmp.eq.s32.totalorder %s9, 0
    %p29 = por %p27, %p28
    %p30 = scmp.ne.s32.totalorder %s19, %s22
    %p31 = scmp.eq.s32.totalorder %s14, 1
    %p32 = por %p30, %p31
    %p33 = scmp.ne.s32.totalorder %s22, %s23
    %p34 = scmp.eq.s32.totalorder %s14, 0
    %p35 = por %p33, %p34
    %p36 = scmp.ne.s32.totalorder %s22, %s23
    %p37 = scmp.eq.s32.totalorder %s15, 1
    %p38 = por %p36, %p37
    %p40 = scmp.ne.s32.totalorder %s23, %s39
    %p41 = scmp.eq.s32.totalorder %s15, 0
    %p42 = por %p40, %p41
    %s44 = sadd.s32 %s43, 1
    %p47 = scmp.eq.s32.totalorder %s9, 1
    %p48 = scmp.ne.s32.totalorder %s43, %s45
    %p49 = scmp.eq.s32.totalorder %s9, 0
    %p50 = por %p48, %p49
    %p51 = scmp.ne.s32.totalorder %s43, %s45
    %p52 = scmp.eq.s32.totalorder %s14, 1
    %p53 = por %p51, %p52
    %p54 = scmp.ne.s32.totalorder %s45, %s46
    %p55 = scmp.eq.s32.totalorder %s14, 0
    %p56 = por %p54, %p55
    %p57 = scmp.ne.s32.totalorder %s45, %s46
    %p58 = scmp.eq.s32.totalorder %s15, 1
    %p59 = por %p57, %p58
    %p61 = scmp.ne.s32.totalorder %s46, %s60
    %p62 = scmp.eq.s32.totalorder %s15, 0
    %p63 = por %p61, %p62
    %s65 = sadd.s32 %s64, 1
    %p68 = scmp.eq.s32.totalorder %s9, 1
    %p69 = scmp.ne.s32.totalorder %s64, %s66
    %p70 = scmp.eq.s32.totalorder %s9, 0
    %p71 = por %p69, %p70
    %p72 = scmp.ne.s32.totalorder %s64, %s66
    %p73 = scmp.eq.s32.totalorder %s14, 1
    %p74 = por %p72, %p73
    %p75 = scmp.ne.s32.totalorder %s66, %s67
    %p76 = scmp.eq.s32.totalorder %s14, 0
    %p77 = por %p75, %p76
    %p78 = scmp.ne.s32.totalorder %s66, %s67
    %p79 = scmp.eq.s32.totalorder %s15, 1
    %p80 = por %p78, %p79
    %p82 = scmp.ne.s32.totalorder %s67, %s81
    %p83 = scmp.eq.s32.totalorder %s15, 0
    %p84 = por %p82, %p83
    %s85 = ssub.s32 %s9, %s16
    %p86 = scmp.eq.s32.totalorder %s85, 0
    %s88 = sadd.s32 %s87, 1
    %s89 = scalar_select %p86, %s87, %s88
    %p92 = pneg %p86
    %p93 = scmp.eq.s32.totalorder %s9, 1
    %p94 = por %p92, %p93
    %p95 = scmp.ne.s32.totalorder %s87, %s90
    %p96 = scmp.eq.s32.totalorder %s9, 0
    %p97 = por %p95, %p96
    %p98 = scmp.ne.s32.totalorder %s87, %s90
    %p99 = scmp.eq.s32.totalorder %s14, 1
    %p100 = por %p98, %p99
    %p101 = scmp.ne.s32.totalorder %s90, %s91
    %p102 = scmp.eq.s32.totalorder %s14, 0
    %p103 = por %p101, %p102
    %p104 = scmp.ne.s32.totalorder %s90, %s91
    %p105 = scmp.eq.s32.totalorder %s15, 1
    %p106 = por %p104, %p105
    %p108 = scmp.ne.s32.totalorder %s91, %s107
    %p109 = scmp.eq.s32.totalorder %s15, 0
    %p110 = por %p108, %p109
    %p111 = scmp.le.s32.totalorder 1, %s9
    %p112 = scmp.lt.s32.totalorder %s9, 3
    %p113 = pnand %p111, %p112
    %p114 = pneg %p113
    // Predicated region
    $region9: #{relu_conv_forward.1} parent=5 // pred_check
      _
    $region10: #{relu_conv_forward.1} parent=5 // pred_check_branch
      %116 = sbr.rel (%p113) target = $region12
    $region11: #{relu_conv_forward.1} parent=5 // pred_region
      %s117 = ssub.s32 %s9, 1
      // Predicated region
      $region13: #{relu_conv_forward.1} parent=11 // pred_check
        %p118 = pneg %p56
      $region14: #{relu_conv_forward.1} parent=11 // pred_check_branch
        %120 = sbr.rel (%p118) target = $region16
      $region15: #{relu_conv_forward.1} parent=11 // pred_region
        _
      $region16: #{relu_conv_forward.1} parent=11 // pred_fallthru
        _
      // Predicated region
      $region17: #{relu_conv_forward.1} parent=11 // pred_check
        %p121 = pneg %p77
      $region18: #{relu_conv_forward.1} parent=11 // pred_check_branch
        %123 = sbr.rel (%p121) target = $region20
      $region19: #{relu_conv_forward.1} parent=11 // pred_region
        _
      $region20: #{relu_conv_forward.1} parent=11 // pred_fallthru
        _
    $region12: #{relu_conv_forward.1} parent=5 // pred_fallthru
      _
    %p124 = scmp.lt.s32.totalorder %s9, 2
    // Predicated region
    $region21: #{relu_conv_forward.1} parent=5 // pred_check
      %p125 = pneg %p124
    $region22: #{relu_conv_forward.1} parent=5 // pred_check_branch
      %127 = sbr.rel (%p125) target = $region24
    $region23: #{relu_conv_forward.1} parent=5 // pred_region
      // Predicated region
      $region25: #{relu_conv_forward.1} parent=23 // pred_check
        %p128 = pneg %p29
      $region26: #{relu_conv_forward.1} parent=23 // pred_check_branch
        %130 = sbr.rel (%p128) target = $region28
      $region27: #{relu_conv_forward.1} parent=23 // pred_region
        %p131 = scmp.lt.s32.totalorder %s9, 1
        %s132 = scalar_select %p131, %s9, 1
        %s133 = smul.addr %s132, 3
        %s134 = smul.addr %s133, 4
        %s135 = scalar_lea.vmem %s0, %s134
      $region28: #{relu_conv_forward.1} parent=23 // pred_fallthru
        _
    $region24: #{relu_conv_forward.1} parent=5 // pred_fallthru
      _
    %p136 = scmp.le.s32.totalorder 1, %s9
    %p137 = scmp.lt.s32.totalorder %s9, 3
    %p138 = pnand %p136, %p137
    %p139 = pneg %p138
    // Predicated region
    $region29: #{relu_conv_forward.1} parent=5 // pred_check
      _
    $region30: #{relu_conv_forward.1} parent=5 // pred_check_branch
      %141 = sbr.rel (%p138) target = $region32
    $region31: #{relu_conv_forward.1} parent=5 // pred_region
      %s142 = ssub.s32 %s9, 1
      %p143 = scmp.lt.s32.totalorder %s14, 1
      %s144 = scalar_select %p143, %s14, 1
      %s145 = smul.addr %s144, 3
      %s146 = smul.addr %s145, 4
      %s147 = scalar_lea.vmem %s0, %s146
      %p148 = pneg %p35
      %p149 = pneg %p32
      %p150 = pneg %p56
      %p151 = pneg %p53
      %p152 = pneg %p77
      %p153 = pneg %p74
      %p154 = pneg %p103
      %p155 = pneg %p100
      %p156 = scmp.lt.s32.totalorder %s14, 1
      %s157 = scalar_select %p156, %s14, 1
      %s158 = smul.addr %s157, 3
      %s159 = smul.addr %s158, 8
      %s160 = scalar_lea.vmem %s3, %s159
      %p161 = scmp.lt.s32.totalorder %s14, 1
      %s162 = scalar_select %p161, %s14, 1
      %s163 = smul.addr %s162, 3
      %s164 = smul.addr %s163, 4
      %s165 = scalar_lea.vmem %s0, %s164
      %p166 = scmp.lt.s32.totalorder %s14, 1
      %s167 = scalar_select %p166, %s14, 1
      %s168 = smul.addr %s167, 3
      %s169 = smul.addr %s168, 8
      %s170 = scalar_lea.vmem %s3, %s169
      %v171 = vld [vmem:[%s2] sm:$0xff]
      %173 = vset.pattern.permute.xlu0 0
      %174 = vperm.xlu0 %173, %v171
      %v175 = vpop.permute.xlu0 %174
      %v177 = vld [vmem:[%s165] sm:$0xff]
      %v178 = vld [vmem:[%s165 + $0x8] sm:$0xf]
      %v179 = vld [vmem:[%s1] sm:$0xff]
      %v182 = vcombine.high %v177, %v177
      %vm183 = vcmask 31744
      %v185 = vsel %vm183, %v179, 0
      %vm187 = vcmask 1043456
      %v188 = vsel %vm187, %v177, 0
      %v190 = vsel %vm187, %v182, 0
      %v192 = vsel %vm187, %v178, 0
      %194 = vmatprep.subr.mxu0 0.0
      %195 = vmatpush1.msra.mxu0 0.0
      %196 = vmatprep.subr.mxu0 0.0
      %197 = vmatpush1.msra.mxu0 0.0
      %198 = vmatprep.subr.mxu0 0.0
      %199 = vmatpush1.msra.mxu0 0.0
      %200 = vmatprep.subr.mxu0 0.0
      %201 = vmatpush1.msra.mxu0 0.0
      %202 = vmatprep.subr.mxu0 0.0
      %203 = vmatpush1.msra.mxu0 0.0
      %204 = vmatprep.subr.mxu0 0.0
      %205 = vmatpush1.msra.mxu0 0.0
      %206 = vmatprep.subr.mxu0 0.0
      %207 = vmatpush1.msra.mxu0 0.0
      %208 = vmatprep.subr.mxu0 0.0
      %209 = vmatpush1.msra.mxu0 0.0
      %210 = vmatprep.subr.mxu0 0.0
      %211 = vmatpush1.msra.mxu0 0.0
      %212 = vmatprep.subr.mxu0 0.0
      %213 = vmatpush1.msra.mxu0 0.0
      %214 = vmatprep.subr.mxu0 0.0
      %215 = vmatpush1.msra.mxu0 0.0
      %216 = vmatprep.subr.mxu0 0.0
      %217 = vmatpush1.msra.mxu0 0.0
      %218 = vmatprep.subr.mxu0 0.0
      %219 = vmatpush1.msra.mxu0 0.0
      %220 = vmatprep.subr.mxu0 0.0
      %221 = vmatpush1.msra.mxu0 0.0
      %222 = vmatprep.subr.mxu0 0.0
      %223 = vmatpush1.msra.mxu0 0.0
      %224 = vmatprep.subr.mxu0 %v190
      %225 = vmatpush1.msra.mxu0 %v188
      %226 = vmatprep.subr.mxu0 0.0
      %227 = vmatpush2.msra.mxu0 0.0
      %228 = vmatprep.subr.mxu0 0.0
      %229 = vmatpush2.msra.mxu0 0.0
      %230 = vmatprep.subr.mxu0 0.0
      %231 = vmatpush2.msra.mxu0 0.0
      %232 = vmatprep.subr.mxu0 0.0
      %233 = vmatpush2.msra.mxu0 0.0
      %234 = vmatprep.subr.mxu0 0.0
      %235 = vmatpush2.msra.mxu0 0.0
      %236 = vmatprep.subr.mxu0 0.0
      %237 = vmatpush2.msra.mxu0 0.0
      %238 = vmatprep.subr.mxu0 0.0
      %239 = vmatpush2.msra.mxu0 0.0
      %240 = vmatprep.subr.mxu0 0.0
      %241 = vmatpush2.msra.mxu0 0.0
      %242 = vmatprep.subr.mxu0 0.0
      %243 = vmatpush2.msra.mxu0 0.0
      %244 = vmatprep.subr.mxu0 0.0
      %245 = vmatpush2.msra.mxu0 0.0
      %246 = vmatprep.subr.mxu0 0.0
      %247 = vmatpush2.msra.mxu0 0.0
      %248 = vmatprep.subr.mxu0 0.0
      %249 = vmatpush2.msra.mxu0 0.0
      %250 = vmatprep.subr.mxu0 0.0
      %251 = vmatpush2.msra.mxu0 0.0
      %252 = vmatprep.subr.mxu0 0.0
      %253 = vmatpush2.msra.mxu0 0.0
      %254 = vmatprep.subr.mxu0 0.0
      %255 = vmatpush2.msra.mxu0 0.0
      %256 = vmatprep.subr.mxu0 0.0
      %257 = vmatpush2.msra.mxu0 0.0
      %258 = vmatprep.mubr.f32.mxu0 0.0
      %259 = vmatmul.mubr.f32.gmra.mxu0 %v185
      %v260 = vpop.f32.mrf.mxu0
      %v261 = vadd.f32 0.0, %v260
      %v262 = vpop.f32.mrf.mxu0
      %v263 = vadd.f32 0.0, %v262
      %264 = vdwg.mxu0
      %265 = vmatprep.subr.mxu0 0.0
      %266 = vmatpush1.msra.mxu0 0.0
      %267 = vmatprep.subr.mxu0 0.0
      %268 = vmatpush1.msra.mxu0 0.0
      %269 = vmatprep.subr.mxu0 0.0
      %270 = vmatpush1.msra.mxu0 0.0
      %271 = vmatprep.subr.mxu0 0.0
      %272 = vmatpush1.msra.mxu0 0.0
      %273 = vmatprep.subr.mxu0 0.0
      %274 = vmatpush1.msra.mxu0 0.0
      %275 = vmatprep.subr.mxu0 0.0
      %276 = vmatpush1.msra.mxu0 0.0
      %277 = vmatprep.subr.mxu0 0.0
      %278 = vmatpush1.msra.mxu0 0.0
      %279 = vmatprep.subr.mxu0 0.0
      %280 = vmatpush1.msra.mxu0 0.0
      %281 = vmatprep.subr.mxu0 0.0
      %282 = vmatpush1.msra.mxu0 0.0
      %283 = vmatprep.subr.mxu0 0.0
      %284 = vmatpush1.msra.mxu0 0.0
      %285 = vmatprep.subr.mxu0 0.0
      %286 = vmatpush1.msra.mxu0 0.0
      %287 = vmatprep.subr.mxu0 0.0
      %288 = vmatpush1.msra.mxu0 0.0
      %289 = vmatprep.subr.mxu0 0.0
      %290 = vmatpush1.msra.mxu0 0.0
      %291 = vmatprep.subr.mxu0 0.0
      %292 = vmatpush1.msra.mxu0 0.0
      %293 = vmatprep.subr.mxu0 0.0
      %294 = vmatpush1.msra.mxu0 0.0
      %295 = vmatprep.subr.mxu0 0.0
      %296 = vmatpush1.msra.mxu0 %v192
      %297 = vmatprep.subr.mxu0 0.0
      %298 = vmatpush2.msra.mxu0 0.0
      %299 = vmatprep.subr.mxu0 0.0
      %300 = vmatpush2.msra.mxu0 0.0
      %301 = vmatprep.subr.mxu0 0.0
      %302 = vmatpush2.msra.mxu0 0.0
      %303 = vmatprep.subr.mxu0 0.0
      %304 = vmatpush2.msra.mxu0 0.0
      %305 = vmatprep.subr.mxu0 0.0
      %306 = vmatpush2.msra.mxu0 0.0
      %307 = vmatprep.subr.mxu0 0.0
      %308 = vmatpush2.msra.mxu0 0.0
      %309 = vmatprep.subr.mxu0 0.0
      %310 = vmatpush2.msra.mxu0 0.0
      %311 = vmatprep.subr.mxu0 0.0
      %312 = vmatpush2.msra.mxu0 0.0
      %313 = vmatprep.subr.mxu0 0.0
      %314 = vmatpush2.msra.mxu0 0.0
      %315 = vmatprep.subr.mxu0 0.0
      %316 = vmatpush2.msra.mxu0 0.0
      %317 = vmatprep.subr.mxu0 0.0
      %318 = vmatpush2.msra.mxu0 0.0
      %319 = vmatprep.subr.mxu0 0.0
      %320 = vmatpush2.msra.mxu0 0.0
      %321 = vmatprep.subr.mxu0 0.0
      %322 = vmatpush2.msra.mxu0 0.0
      %323 = vmatprep.subr.mxu0 0.0
      %324 = vmatpush2.msra.mxu0 0.0
      %325 = vmatprep.subr.mxu0 0.0
      %326 = vmatpush2.msra.mxu0 0.0
      %327 = vmatprep.subr.mxu0 0.0
      %328 = vmatpush2.msra.mxu0 0.0
      %329 = vmatprep.mubr.f32.mxu0 0.0
      %330 = vmatmul.mubr.f32.gmra.mxu0 %v185
      %v331 = vpop.f32.mrf.mxu0
      %v332 = vadd.f32 0.0, %v331
      %v333 = vpop.f32.mrf.mxu0
      %334 = vdwg.mxu0
      %v335 = vadd.f32 %v175, %v261
      %v336 = vadd.f32 %v175, %v263
      %v337 = vadd.f32 %v175, %v332
      %v338 = vld [vmem:[%s165] sm:$0xff]
      %v339 = vld [vmem:[%s165 + $0x8] sm:$0xf]
      %s340 = scalar_lea.vmem %s1, 8
      %v341 = vld [vmem:[%s340] sm:$0xff]
      %v344 = vcombine.high %v338, %v338
      %345 = vrot.lane.b32.xlu0 %v338, 127
      %v346 = vpop.permute.xlu0 %345
      %347 = vrot.lane.b32.xlu0 %v344, 127
      %v348 = vpop.permute.xlu0 %347
      %349 = vrot.lane.b32.xlu0 %v339, 127
      %v350 = vpop.permute.xlu0 %349
      %vm351 = vcmask 1039360
      %v352 = vsel %vm351, %v346, %v348
      %v353 = vsel %vm351, %v348, %v350
      %v355 = vsel %vm183, %v341, 0
      %v357 = vsel %vm187, %v352, 0
      %v359 = vsel %vm187, %v353, 0
      %v361 = vsel %vm187, %v350, 0
      %363 = vmatprep.subr.mxu0 0.0
      %364 = vmatpush1.msra.mxu0 0.0
      %365 = vmatprep.subr.mxu0 0.0
      %366 = vmatpush1.msra.mxu0 0.0
      %367 = vmatprep.subr.mxu0 0.0
      %368 = vmatpush1.msra.mxu0 0.0
      %369 = vmatprep.subr.mxu0 0.0
      %370 = vmatpush1.msra.mxu0 0.0
      %371 = vmatprep.subr.mxu0 0.0
      %372 = vmatpush1.msra.mxu0 0.0
      %373 = vmatprep.subr.mxu0 0.0
      %374 = vmatpush1.msra.mxu0 0.0
      %375 = vmatprep.subr.mxu0 0.0
      %376 = vmatpush1.msra.mxu0 0.0
      %377 = vmatprep.subr.mxu0 0.0
      %378 = vmatpush1.msra.mxu0 0.0
      %379 = vmatprep.subr.mxu0 0.0
      %380 = vmatpush1.msra.mxu0 0.0
      %381 = vmatprep.subr.mxu0 0.0
      %382 = vmatpush1.msra.mxu0 0.0
      %383 = vmatprep.subr.mxu0 0.0
      %384 = vmatpush1.msra.mxu0 0.0
      %385 = vmatprep.subr.mxu0 0.0
      %386 = vmatpush1.msra.mxu0 0.0
      %387 = vmatprep.subr.mxu0 0.0
      %388 = vmatpush1.msra.mxu0 0.0
      %389 = vmatprep.subr.mxu0 0.0
      %390 = vmatpush1.msra.mxu0 0.0
      %391 = vmatprep.subr.mxu0 0.0
      %392 = vmatpush1.msra.mxu0 0.0
      %393 = vmatprep.subr.mxu0 %v359
      %394 = vmatpush1.msra.mxu0 %v357
      %395 = vmatprep.subr.mxu0 0.0
      %396 = vmatpush2.msra.mxu0 0.0
      %397 = vmatprep.subr.mxu0 0.0
      %398 = vmatpush2.msra.mxu0 0.0
      %399 = vmatprep.subr.mxu0 0.0
      %400 = vmatpush2.msra.mxu0 0.0
      %401 = vmatprep.subr.mxu0 0.0
      %402 = vmatpush2.msra.mxu0 0.0
      %403 = vmatprep.subr.mxu0 0.0
      %404 = vmatpush2.msra.mxu0 0.0
      %405 = vmatprep.subr.mxu0 0.0
      %406 = vmatpush2.msra.mxu0 0.0
      %407 = vmatprep.subr.mxu0 0.0
      %408 = vmatpush2.msra.mxu0 0.0
      %409 = vmatprep.subr.mxu0 0.0
      %410 = vmatpush2.msra.mxu0 0.0
      %411 = vmatprep.subr.mxu0 0.0
      %412 = vmatpush2.msra.mxu0 0.0
      %413 = vmatprep.subr.mxu0 0.0
      %414 = vmatpush2.msra.mxu0 0.0
      %415 = vmatprep.subr.mxu0 0.0
      %416 = vmatpush2.msra.mxu0 0.0
      %417 = vmatprep.subr.mxu0 0.0
      %418 = vmatpush2.msra.mxu0 0.0
      %419 = vmatprep.subr.mxu0 0.0
      %420 = vmatpush2.msra.mxu0 0.0
      %421 = vmatprep.subr.mxu0 0.0
      %422 = vmatpush2.msra.mxu0 0.0
      %423 = vmatprep.subr.mxu0 0.0
      %424 = vmatpush2.msra.mxu0 0.0
      %425 = vmatprep.subr.mxu0 0.0
      %426 = vmatpush2.msra.mxu0 0.0
      %427 = vmatprep.mubr.f32.mxu0 0.0
      %428 = vmatmul.mubr.f32.gmra.mxu0 %v355
      %v429 = vpop.f32.mrf.mxu0
      %v430 = vadd.f32 0.0, %v429
      %v431 = vpop.f32.mrf.mxu0
      %v432 = vadd.f32 0.0, %v431
      %433 = vdwg.mxu0
      %434 = vmatprep.subr.mxu0 0.0
      %435 = vmatpush1.msra.mxu0 0.0
      %436 = vmatprep.subr.mxu0 0.0
      %437 = vmatpush1.msra.mxu0 0.0
      %438 = vmatprep.subr.mxu0 0.0
      %439 = vmatpush1.msra.mxu0 0.0
      %440 = vmatprep.subr.mxu0 0.0
      %441 = vmatpush1.msra.mxu0 0.0
      %442 = vmatprep.subr.mxu0 0.0
      %443 = vmatpush1.msra.mxu0 0.0
      %444 = vmatprep.subr.mxu0 0.0
      %445 = vmatpush1.msra.mxu0 0.0
      %446 = vmatprep.subr.mxu0 0.0
      %447 = vmatpush1.msra.mxu0 0.0
      %448 = vmatprep.subr.mxu0 0.0
      %449 = vmatpush1.msra.mxu0 0.0
      %450 = vmatprep.subr.mxu0 0.0
      %451 = vmatpush1.msra.mxu0 0.0
      %452 = vmatprep.subr.mxu0 0.0
      %453 = vmatpush1.msra.mxu0 0.0
      %454 = vmatprep.subr.mxu0 0.0
      %455 = vmatpush1.msra.mxu0 0.0
      %456 = vmatprep.subr.mxu0 0.0
      %457 = vmatpush1.msra.mxu0 0.0
      %458 = vmatprep.subr.mxu0 0.0
      %459 = vmatpush1.msra.mxu0 0.0
      %460 = vmatprep.subr.mxu0 0.0
      %461 = vmatpush1.msra.mxu0 0.0
      %462 = vmatprep.subr.mxu0 0.0
      %463 = vmatpush1.msra.mxu0 0.0
      %464 = vmatprep.subr.mxu0 0.0
      %465 = vmatpush1.msra.mxu0 %v361
      %466 = vmatprep.subr.mxu0 0.0
      %467 = vmatpush2.msra.mxu0 0.0
      %468 = vmatprep.subr.mxu0 0.0
      %469 = vmatpush2.msra.mxu0 0.0
      %470 = vmatprep.subr.mxu0 0.0
      %471 = vmatpush2.msra.mxu0 0.0
      %472 = vmatprep.subr.mxu0 0.0
      %473 = vmatpush2.msra.mxu0 0.0
      %474 = vmatprep.subr.mxu0 0.0
      %475 = vmatpush2.msra.mxu0 0.0
      %476 = vmatprep.subr.mxu0 0.0
      %477 = vmatpush2.msra.mxu0 0.0
      %478 = vmatprep.subr.mxu0 0.0
      %479 = vmatpush2.msra.mxu0 0.0
      %480 = vmatprep.subr.mxu0 0.0
      %481 = vmatpush2.msra.mxu0 0.0
      %482 = vmatprep.subr.mxu0 0.0
      %483 = vmatpush2.msra.mxu0 0.0
      %484 = vmatprep.subr.mxu0 0.0
      %485 = vmatpush2.msra.mxu0 0.0
      %486 = vmatprep.subr.mxu0 0.0
      %487 = vmatpush2.msra.mxu0 0.0
      %488 = vmatprep.subr.mxu0 0.0
      %489 = vmatpush2.msra.mxu0 0.0
      %490 = vmatprep.subr.mxu0 0.0
      %491 = vmatpush2.msra.mxu0 0.0
      %492 = vmatprep.subr.mxu0 0.0
      %493 = vmatpush2.msra.mxu0 0.0
      %494 = vmatprep.subr.mxu0 0.0
      %495 = vmatpush2.msra.mxu0 0.0
      %496 = vmatprep.subr.mxu0 0.0
      %497 = vmatpush2.msra.mxu0 0.0
      %498 = vmatprep.mubr.f32.mxu0 0.0
      %499 = vmatmul.mubr.f32.gmra.mxu0 %v355
      %v500 = vpop.f32.mrf.mxu0
      %v501 = vadd.f32 0.0, %v500
      %v502 = vpop.f32.mrf.mxu0
      %503 = vdwg.mxu0
      %v504 = vadd.f32 %v335, %v430
      %v505 = vadd.f32 %v336, %v432
      %v506 = vadd.f32 %v337, %v501
      %v507 = vld [vmem:[%s165] sm:$0xff]
      %v508 = vld [vmem:[%s165 + $0x8] sm:$0xf]
      %s509 = scalar_lea.vmem %s1, 16
      %v510 = vld [vmem:[%s509] sm:$0xff]
      %v513 = vcombine.high %v507, %v507
      %514 = vrot.lane.b32.xlu0 %v507, 126
      %v515 = vpop.permute.xlu0 %514
      %516 = vrot.lane.b32.xlu0 %v513, 126
      %v517 = vpop.permute.xlu0 %516
      %518 = vrot.lane.b32.xlu0 %v508, 126
      %v519 = vpop.permute.xlu0 %518
      %vm520 = vcmask 1031168
      %v521 = vsel %vm520, %v515, %v517
      %v522 = vsel %vm520, %v517, %v519
      %v524 = vsel %vm183, %v510, 0
      %v526 = vsel %vm187, %v521, 0
      %v528 = vsel %vm187, %v522, 0
      %v530 = vsel %vm187, %v519, 0
      %532 = vmatprep.subr.mxu0 0.0
      %533 = vmatpush1.msra.mxu0 0.0
      %534 = vmatprep.subr.mxu0 0.0
      %535 = vmatpush1.msra.mxu0 0.0
      %536 = vmatprep.subr.mxu0 0.0
      %537 = vmatpush1.msra.mxu0 0.0
      %538 = vmatprep.subr.mxu0 0.0
      %539 = vmatpush1.msra.mxu0 0.0
      %540 = vmatprep.subr.mxu0 0.0
      %541 = vmatpush1.msra.mxu0 0.0
      %542 = vmatprep.subr.mxu0 0.0
      %543 = vmatpush1.msra.mxu0 0.0
      %544 = vmatprep.subr.mxu0 0.0
      %545 = vmatpush1.msra.mxu0 0.0
      %546 = vmatprep.subr.mxu0 0.0
      %547 = vmatpush1.msra.mxu0 0.0
      %548 = vmatprep.subr.mxu0 0.0
      %549 = vmatpush1.msra.mxu0 0.0
      %550 = vmatprep.subr.mxu0 0.0
      %551 = vmatpush1.msra.mxu0 0.0
      %552 = vmatprep.subr.mxu0 0.0
      %553 = vmatpush1.msra.mxu0 0.0
      %554 = vmatprep.subr.mxu0 0.0
      %555 = vmatpush1.msra.mxu0 0.0
      %556 = vmatprep.subr.mxu0 0.0
      %557 = vmatpush1.msra.mxu0 0.0
      %558 = vmatprep.subr.mxu0 0.0
      %559 = vmatpush1.msra.mxu0 0.0
      %560 = vmatprep.subr.mxu0 0.0
      %561 = vmatpush1.msra.mxu0 0.0
      %562 = vmatprep.subr.mxu0 %v528
      %563 = vmatpush1.msra.mxu0 %v526
      %564 = vmatprep.subr.mxu0 0.0
      %565 = vmatpush2.msra.mxu0 0.0
      %566 = vmatprep.subr.mxu0 0.0
      %567 = vmatpush2.msra.mxu0 0.0
      %568 = vmatprep.subr.mxu0 0.0
      %569 = vmatpush2.msra.mxu0 0.0
      %570 = vmatprep.subr.mxu0 0.0
      %571 = vmatpush2.msra.mxu0 0.0
      %572 = vmatprep.subr.mxu0 0.0
      %573 = vmatpush2.msra.mxu0 0.0
      %574 = vmatprep.subr.mxu0 0.0
      %575 = vmatpush2.msra.mxu0 0.0
      %576 = vmatprep.subr.mxu0 0.0
      %577 = vmatpush2.msra.mxu0 0.0
      %578 = vmatprep.subr.mxu0 0.0
      %579 = vmatpush2.msra.mxu0 0.0
      %580 = vmatprep.subr.mxu0 0.0
      %581 = vmatpush2.msra.mxu0 0.0
      %582 = vmatprep.subr.mxu0 0.0
      %583 = vmatpush2.msra.mxu0 0.0
      %584 = vmatprep.subr.mxu0 0.0
      %585 = vmatpush2.msra.mxu0 0.0
      %586 = vmatprep.subr.mxu0 0.0
      %587 = vmatpush2.msra.mxu0 0.0
      %588 = vmatprep.subr.mxu0 0.0
      %589 = vmatpush2.msra.mxu0 0.0
      %590 = vmatprep.subr.mxu0 0.0
      %591 = vmatpush2.msra.mxu0 0.0
      %592 = vmatprep.subr.mxu0 0.0
      %593 = vmatpush2.msra.mxu0 0.0
      %594 = vmatprep.subr.mxu0 0.0
      %595 = vmatpush2.msra.mxu0 0.0
      %596 = vmatprep.mubr.f32.mxu0 0.0
      %597 = vmatmul.mubr.f32.gmra.mxu0 %v524
      %v598 = vpop.f32.mrf.mxu0
      %v599 = vadd.f32 0.0, %v598
      %v600 = vpop.f32.mrf.mxu0
      %v601 = vadd.f32 0.0, %v600
      %602 = vdwg.mxu0
      %603 = vmatprep.subr.mxu0 0.0
      %604 = vmatpush1.msra.mxu0 0.0
      %605 = vmatprep.subr.mxu0 0.0
      %606 = vmatpush1.msra.mxu0 0.0
      %607 = vmatprep.subr.mxu0 0.0
      %608 = vmatpush1.msra.mxu0 0.0
      %609 = vmatprep.subr.mxu0 0.0
      %610 = vmatpush1.msra.mxu0 0.0
      %611 = vmatprep.subr.mxu0 0.0
      %612 = vmatpush1.msra.mxu0 0.0
      %613 = vmatprep.subr.mxu0 0.0
      %614 = vmatpush1.msra.mxu0 0.0
      %615 = vmatprep.subr.mxu0 0.0
      %616 = vmatpush1.msra.mxu0 0.0
      %617 = vmatprep.subr.mxu0 0.0
      %618 = vmatpush1.msra.mxu0 0.0
      %619 = vmatprep.subr.mxu0 0.0
      %620 = vmatpush1.msra.mxu0 0.0
      %621 = vmatprep.subr.mxu0 0.0
      %622 = vmatpush1.msra.mxu0 0.0
      %623 = vmatprep.subr.mxu0 0.0
      %624 = vmatpush1.msra.mxu0 0.0
      %625 = vmatprep.subr.mxu0 0.0
      %626 = vmatpush1.msra.mxu0 0.0
      %627 = vmatprep.subr.mxu0 0.0
      %628 = vmatpush1.msra.mxu0 0.0
      %629 = vmatprep.subr.mxu0 0.0
      %630 = vmatpush1.msra.mxu0 0.0
      %631 = vmatprep.subr.mxu0 0.0
      %632 = vmatpush1.msra.mxu0 0.0
      %633 = vmatprep.subr.mxu0 0.0
      %634 = vmatpush1.msra.mxu0 %v530
      %635 = vmatprep.subr.mxu0 0.0
      %636 = vmatpush2.msra.mxu0 0.0
      %637 = vmatprep.subr.mxu0 0.0
      %638 = vmatpush2.msra.mxu0 0.0
      %639 = vmatprep.subr.mxu0 0.0
      %640 = vmatpush2.msra.mxu0 0.0
      %641 = vmatprep.subr.mxu0 0.0
      %642 = vmatpush2.msra.mxu0 0.0
      %643 = vmatprep.subr.mxu0 0.0
      %644 = vmatpush2.msra.mxu0 0.0
      %645 = vmatprep.subr.mxu0 0.0
      %646 = vmatpush2.msra.mxu0 0.0
      %647 = vmatprep.subr.mxu0 0.0
      %648 = vmatpush2.msra.mxu0 0.0
      %649 = vmatprep.subr.mxu0 0.0
      %650 = vmatpush2.msra.mxu0 0.0
      %651 = vmatprep.subr.mxu0 0.0
      %652 = vmatpush2.msra.mxu0 0.0
      %653 = vmatprep.subr.mxu0 0.0
      %654 = vmatpush2.msra.mxu0 0.0
      %655 = vmatprep.subr.mxu0 0.0
      %656 = vmatpush2.msra.mxu0 0.0
      %657 = vmatprep.subr.mxu0 0.0
      %658 = vmatpush2.msra.mxu0 0.0
      %659 = vmatprep.subr.mxu0 0.0
      %660 = vmatpush2.msra.mxu0 0.0
      %661 = vmatprep.subr.mxu0 0.0
      %662 = vmatpush2.msra.mxu0 0.0
      %663 = vmatprep.subr.mxu0 0.0
      %664 = vmatpush2.msra.mxu0 0.0
      %665 = vmatprep.subr.mxu0 0.0
      %666 = vmatpush2.msra.mxu0 0.0
      %667 = vmatprep.mubr.f32.mxu0 0.0
      %668 = vmatmul.mubr.f32.gmra.mxu0 %v524
      %v669 = vpop.f32.mrf.mxu0
      %v670 = vadd.f32 0.0, %v669
      %v671 = vpop.f32.mrf.mxu0
      %672 = vdwg.mxu0
      %v673 = vadd.f32 %v504, %v599
      %v674 = vadd.f32 %v505, %v601
      %v675 = vadd.f32 %v506, %v670
      %v676 = vld [vmem:[%s165] sm:$0xff]
      %v677 = vld [vmem:[%s165 + $0x8] sm:$0xf]
      %s678 = scalar_lea.vmem %s1, 24
      %v679 = vld [vmem:[%s678] sm:$0xff]
      %v682 = vcombine.high %v676, %v676
      %683 = vrot.lane.b32.xlu0 %v676, 110
      %v684 = vpop.permute.xlu0 %683
      %685 = vrot.lane.b32.xlu0 %v682, 110
      %v686 = vpop.permute.xlu0 %685
      %687 = vrot.lane.b32.xlu0 %v677, 110
      %v688 = vpop.permute.xlu0 %687
      %vm689 = vcmask 900096
      %v690 = vsel %vm689, %v684, %v686
      %v691 = vsel %vm689, %v686, %v688
      %v693 = vsel %vm183, %v679, 0
      %v695 = vsel %vm187, %v690, 0
      %v697 = vsel %vm187, %v691, 0
      %v699 = vsel %vm187, %v688, 0
      %701 = vmatprep.subr.mxu0 0.0
      %702 = vmatpush1.msra.mxu0 0.0
      %703 = vmatprep.subr.mxu0 0.0
      %704 = vmatpush1.msra.mxu0 0.0
      %705 = vmatprep.subr.mxu0 0.0
      %706 = vmatpush1.msra.mxu0 0.0
      %707 = vmatprep.subr.mxu0 0.0
      %708 = vmatpush1.msra.mxu0 0.0
      %709 = vmatprep.subr.mxu0 0.0
      %710 = vmatpush1.msra.mxu0 0.0
      %711 = vmatprep.subr.mxu0 0.0
      %712 = vmatpush1.msra.mxu0 0.0
      %713 = vmatprep.subr.mxu0 0.0
      %714 = vmatpush1.msra.mxu0 0.0
      %715 = vmatprep.subr.mxu0 0.0
      %716 = vmatpush1.msra.mxu0 0.0
      %717 = vmatprep.subr.mxu0 0.0
      %718 = vmatpush1.msra.mxu0 0.0
      %719 = vmatprep.subr.mxu0 0.0
      %720 = vmatpush1.msra.mxu0 0.0
      %721 = vmatprep.subr.mxu0 0.0
      %722 = vmatpush1.msra.mxu0 0.0
      %723 = vmatprep.subr.mxu0 0.0
      %724 = vmatpush1.msra.mxu0 0.0
      %725 = vmatprep.subr.mxu0 0.0
      %726 = vmatpush1.msra.mxu0 0.0
      %727 = vmatprep.subr.mxu0 0.0
      %728 = vmatpush1.msra.mxu0 0.0
      %729 = vmatprep.subr.mxu0 0.0
      %730 = vmatpush1.msra.mxu0 0.0
      %731 = vmatprep.subr.mxu0 %v697
      %732 = vmatpush1.msra.mxu0 %v695
      %733 = vmatprep.subr.mxu0 0.0
      %734 = vmatpush2.msra.mxu0 0.0
      %735 = vmatprep.subr.mxu0 0.0
      %736 = vmatpush2.msra.mxu0 0.0
      %737 = vmatprep.subr.mxu0 0.0
      %738 = vmatpush2.msra.mxu0 0.0
      %739 = vmatprep.subr.mxu0 0.0
      %740 = vmatpush2.msra.mxu0 0.0
      %741 = vmatprep.subr.mxu0 0.0
      %742 = vmatpush2.msra.mxu0 0.0
      %743 = vmatprep.subr.mxu0 0.0
      %744 = vmatpush2.msra.mxu0 0.0
      %745 = vmatprep.subr.mxu0 0.0
      %746 = vmatpush2.msra.mxu0 0.0
      %747 = vmatprep.subr.mxu0 0.0
      %748 = vmatpush2.msra.mxu0 0.0
      %749 = vmatprep.subr.mxu0 0.0
      %750 = vmatpush2.msra.mxu0 0.0
      %751 = vmatprep.subr.mxu0 0.0
      %752 = vmatpush2.msra.mxu0 0.0
      %753 = vmatprep.subr.mxu0 0.0
      %754 = vmatpush2.msra.mxu0 0.0
      %755 = vmatprep.subr.mxu0 0.0
      %756 = vmatpush2.msra.mxu0 0.0
      %757 = vmatprep.subr.mxu0 0.0
      %758 = vmatpush2.msra.mxu0 0.0
      %759 = vmatprep.subr.mxu0 0.0
      %760 = vmatpush2.msra.mxu0 0.0
      %761 = vmatprep.subr.mxu0 0.0
      %762 = vmatpush2.msra.mxu0 0.0
      %763 = vmatprep.subr.mxu0 0.0
      %764 = vmatpush2.msra.mxu0 0.0
      %765 = vmatprep.mubr.f32.mxu0 0.0
      %766 = vmatmul.mubr.f32.gmra.mxu0 %v693
      %v767 = vpop.f32.mrf.mxu0
      %v768 = vadd.f32 0.0, %v767
      %v769 = vpop.f32.mrf.mxu0
      %v770 = vadd.f32 0.0, %v769
      %771 = vdwg.mxu0
      %772 = vmatprep.subr.mxu0 0.0
      %773 = vmatpush1.msra.mxu0 0.0
      %774 = vmatprep.subr.mxu0 0.0
      %775 = vmatpush1.msra.mxu0 0.0
      %776 = vmatprep.subr.mxu0 0.0
      %777 = vmatpush1.msra.mxu0 0.0
      %778 = vmatprep.subr.mxu0 0.0
      %779 = vmatpush1.msra.mxu0 0.0
      %780 = vmatprep.subr.mxu0 0.0
      %781 = vmatpush1.msra.mxu0 0.0
      %782 = vmatprep.subr.mxu0 0.0
      %783 = vmatpush1.msra.mxu0 0.0
      %784 = vmatprep.subr.mxu0 0.0
      %785 = vmatpush1.msra.mxu0 0.0
      %786 = vmatprep.subr.mxu0 0.0
      %787 = vmatpush1.msra.mxu0 0.0
      %788 = vmatprep.subr.mxu0 0.0
      %789 = vmatpush1.msra.mxu0 0.0
      %790 = vmatprep.subr.mxu0 0.0
      %791 = vmatpush1.msra.mxu0 0.0
      %792 = vmatprep.subr.mxu0 0.0
      %793 = vmatpush1.msra.mxu0 0.0
      %794 = vmatprep.subr.mxu0 0.0
      %795 = vmatpush1.msra.mxu0 0.0
      %796 = vmatprep.subr.mxu0 0.0
      %797 = vmatpush1.msra.mxu0 0.0
      %798 = vmatprep.subr.mxu0 0.0
      %799 = vmatpush1.msra.mxu0 0.0
      %800 = vmatprep.subr.mxu0 0.0
      %801 = vmatpush1.msra.mxu0 0.0
      %802 = vmatprep.subr.mxu0 0.0
      %803 = vmatpush1.msra.mxu0 %v699
      %804 = vmatprep.subr.mxu0 0.0
      %805 = vmatpush2.msra.mxu0 0.0
      %806 = vmatprep.subr.mxu0 0.0
      %807 = vmatpush2.msra.mxu0 0.0
      %808 = vmatprep.subr.mxu0 0.0
      %809 = vmatpush2.msra.mxu0 0.0
      %810 = vmatprep.subr.mxu0 0.0
      %811 = vmatpush2.msra.mxu0 0.0
      %812 = vmatprep.subr.mxu0 0.0
      %813 = vmatpush2.msra.mxu0 0.0
      %814 = vmatprep.subr.mxu0 0.0
      %815 = vmatpush2.msra.mxu0 0.0
      %816 = vmatprep.subr.mxu0 0.0
      %817 = vmatpush2.msra.mxu0 0.0
      %818 = vmatprep.subr.mxu0 0.0
      %819 = vmatpush2.msra.mxu0 0.0
      %820 = vmatprep.subr.mxu0 0.0
      %821 = vmatpush2.msra.mxu0 0.0
      %822 = vmatprep.subr.mxu0 0.0
      %823 = vmatpush2.msra.mxu0 0.0
      %824 = vmatprep.subr.mxu0 0.0
      %825 = vmatpush2.msra.mxu0 0.0
      %826 = vmatprep.subr.mxu0 0.0
      %827 = vmatpush2.msra.mxu0 0.0
      %828 = vmatprep.subr.mxu0 0.0
      %829 = vmatpush2.msra.mxu0 0.0
      %830 = vmatprep.subr.mxu0 0.0
      %831 = vmatpush2.msra.mxu0 0.0
      %832 = vmatprep.subr.mxu0 0.0
      %833 = vmatpush2.msra.mxu0 0.0
      %834 = vmatprep.subr.mxu0 0.0
      %835 = vmatpush2.msra.mxu0 0.0
      %836 = vmatprep.mubr.f32.mxu0 0.0
      %837 = vmatmul.mubr.f32.gmra.mxu0 %v693
      %v838 = vpop.f32.mrf.mxu0
      %v839 = vadd.f32 0.0, %v838
      %v840 = vpop.f32.mrf.mxu0
      %841 = vdwg.mxu0
      %v842 = vadd.f32 %v673, %v768
      %v843 = vadd.f32 %v674, %v770
      %v844 = vadd.f32 %v675, %v839
      %v845 = vld [vmem:[%s165] sm:$0xff]
      %v846 = vld [vmem:[%s165 + $0x8] sm:$0xf]
      %s847 = scalar_lea.vmem %s1, 32
      %v848 = vld [vmem:[%s847] sm:$0xff]
      %v851 = vcombine.high %v845, %v845
      %852 = vrot.lane.b32.xlu0 %v845, 109
      %v853 = vpop.permute.xlu0 %852
      %854 = vrot.lane.b32.xlu0 %v851, 109
      %v855 = vpop.permute.xlu0 %854
      %856 = vrot.lane.b32.xlu0 %v846, 109
      %v857 = vpop.permute.xlu0 %856
      %vm858 = vcmask 891904
      %v859 = vsel %vm858, %v853, %v855
      %v860 = vsel %vm858, %v855, %v857
      %v862 = vsel %vm183, %v848, 0
      %v864 = vsel %vm187, %v859, 0
      %v866 = vsel %vm187, %v860, 0
      %v868 = vsel %vm187, %v857, 0
      %870 = vmatprep.subr.mxu0 0.0
      %871 = vmatpush1.msra.mxu0 0.0
      %872 = vmatprep.subr.mxu0 0.0
      %873 = vmatpush1.msra.mxu0 0.0
      %874 = vmatprep.subr.mxu0 0.0
      %875 = vmatpush1.msra.mxu0 0.0
      %876 = vmatprep.subr.mxu0 0.0
      %877 = vmatpush1.msra.mxu0 0.0
      %878 = vmatprep.subr.mxu0 0.0
      %879 = vmatpush1.msra.mxu0 0.0
      %880 = vmatprep.subr.mxu0 0.0
      %881 = vmatpush1.msra.mxu0 0.0
      %882 = vmatprep.subr.mxu0 0.0
      %883 = vmatpush1.msra.mxu0 0.0
      %884 = vmatprep.subr.mxu0 0.0
      %885 = vmatpush1.msra.mxu0 0.0
      %886 = vmatprep.subr.mxu0 0.0
      %887 = vmatpush1.msra.mxu0 0.0
      %888 = vmatprep.subr.mxu0 0.0
      %889 = vmatpush1.msra.mxu0 0.0
      %890 = vmatprep.subr.mxu0 0.0
      %891 = vmatpush1.msra.mxu0 0.0
      %892 = vmatprep.subr.mxu0 0.0
      %893 = vmatpush1.msra.mxu0 0.0
      %894 = vmatprep.subr.mxu0 0.0
      %895 = vmatpush1.msra.mxu0 0.0
      %896 = vmatprep.subr.mxu0 0.0
      %897 = vmatpush1.msra.mxu0 0.0
      %898 = vmatprep.subr.mxu0 0.0
      %899 = vmatpush1.msra.mxu0 0.0
      %900 = vmatprep.subr.mxu0 %v866
      %901 = vmatpush1.msra.mxu0 %v864
      %902 = vmatprep.subr.mxu0 0.0
      %903 = vmatpush2.msra.mxu0 0.0
      %904 = vmatprep.subr.mxu0 0.0
      %905 = vmatpush2.msra.mxu0 0.0
      %906 = vmatprep.subr.mxu0 0.0
      %907 = vmatpush2.msra.mxu0 0.0
      %908 = vmatprep.subr.mxu0 0.0
      %909 = vmatpush2.msra.mxu0 0.0
      %910 = vmatprep.subr.mxu0 0.0
      %911 = vmatpush2.msra.mxu0 0.0
      %912 = vmatprep.subr.mxu0 0.0
      %913 = vmatpush2.msra.mxu0 0.0
      %914 = vmatprep.subr.mxu0 0.0
      %915 = vmatpush2.msra.mxu0 0.0
      %916 = vmatprep.subr.mxu0 0.0
      %917 = vmatpush2.msra.mxu0 0.0
      %918 = vmatprep.subr.mxu0 0.0
      %919 = vmatpush2.msra.mxu0 0.0
      %920 = vmatprep.subr.mxu0 0.0
      %921 = vmatpush2.msra.mxu0 0.0
      %922 = vmatprep.subr.mxu0 0.0
      %923 = vmatpush2.msra.mxu0 0.0
      %924 = vmatprep.subr.mxu0 0.0
      %925 = vmatpush2.msra.mxu0 0.0
      %926 = vmatprep.subr.mxu0 0.0
      %927 = vmatpush2.msra.mxu0 0.0
      %928 = vmatprep.subr.mxu0 0.0
      %929 = vmatpush2.msra.mxu0 0.0
      %930 = vmatprep.subr.mxu0 0.0
      %931 = vmatpush2.msra.mxu0 0.0
      %932 = vmatprep.subr.mxu0 0.0
      %933 = vmatpush2.msra.mxu0 0.0
      %934 = vmatprep.mubr.f32.mxu0 0.0
      %935 = vmatmul.mubr.f32.gmra.mxu0 %v862
      %v936 = vpop.f32.mrf.mxu0
      %v937 = vadd.f32 0.0, %v936
      %v938 = vpop.f32.mrf.mxu0
      %v939 = vadd.f32 0.0, %v938
      %940 = vdwg.mxu0
      %941 = vmatprep.subr.mxu0 0.0
      %942 = vmatpush1.msra.mxu0 0.0
      %943 = vmatprep.subr.mxu0 0.0
      %944 = vmatpush1.msra.mxu0 0.0
      %945 = vmatprep.subr.mxu0 0.0
      %946 = vmatpush1.msra.mxu0 0.0
      %947 = vmatprep.subr.mxu0 0.0
      %948 = vmatpush1.msra.mxu0 0.0
      %949 = vmatprep.subr.mxu0 0.0
      %950 = vmatpush1.msra.mxu0 0.0
      %951 = vmatprep.subr.mxu0 0.0
      %952 = vmatpush1.msra.mxu0 0.0
      %953 = vmatprep.subr.mxu0 0.0
      %954 = vmatpush1.msra.mxu0 0.0
      %955 = vmatprep.subr.mxu0 0.0
      %956 = vmatpush1.msra.mxu0 0.0
      %957 = vmatprep.subr.mxu0 0.0
      %958 = vmatpush1.msra.mxu0 0.0
      %959 = vmatprep.subr.mxu0 0.0
      %960 = vmatpush1.msra.mxu0 0.0
      %961 = vmatprep.subr.mxu0 0.0
      %962 = vmatpush1.msra.mxu0 0.0
      %963 = vmatprep.subr.mxu0 0.0
      %964 = vmatpush1.msra.mxu0 0.0
      %965 = vmatprep.subr.mxu0 0.0
      %966 = vmatpush1.msra.mxu0 0.0
      %967 = vmatprep.subr.mxu0 0.0
      %968 = vmatpush1.msra.mxu0 0.0
      %969 = vmatprep.subr.mxu0 0.0
      %970 = vmatpush1.msra.mxu0 0.0
      %971 = vmatprep.subr.mxu0 0.0
      %972 = vmatpush1.msra.mxu0 %v868
      %973 = vmatprep.subr.mxu0 0.0
      %974 = vmatpush2.msra.mxu0 0.0
      %975 = vmatprep.subr.mxu0 0.0
      %976 = vmatpush2.msra.mxu0 0.0
      %977 = vmatprep.subr.mxu0 0.0
      %978 = vmatpush2.msra.mxu0 0.0
      %979 = vmatprep.subr.mxu0 0.0
      %980 = vmatpush2.msra.mxu0 0.0
      %981 = vmatprep.subr.mxu0 0.0
      %982 = vmatpush2.msra.mxu0 0.0
      %983 = vmatprep.subr.mxu0 0.0
      %984 = vmatpush2.msra.mxu0 0.0
      %985 = vmatprep.subr.mxu0 0.0
      %986 = vmatpush2.msra.mxu0 0.0
      %987 = vmatprep.subr.mxu0 0.0
      %988 = vmatpush2.msra.mxu0 0.0
      %989 = vmatprep.subr.mxu0 0.0
      %990 = vmatpush2.msra.mxu0 0.0
      %991 = vmatprep.subr.mxu0 0.0
      %992 = vmatpush2.msra.mxu0 0.0
      %993 = vmatprep.subr.mxu0 0.0
      %994 = vmatpush2.msra.mxu0 0.0
      %995 = vmatprep.subr.mxu0 0.0
      %996 = vmatpush2.msra.mxu0 0.0
      %997 = vmatprep.subr.mxu0 0.0
      %998 = vmatpush2.msra.mxu0 0.0
      %999 = vmatprep.subr.mxu0 0.0
      %1000 = vmatpush2.msra.mxu0 0.0
      %1001 = vmatprep.subr.mxu0 0.0
      %1002 = vmatpush2.msra.mxu0 0.0
      %1003 = vmatprep.subr.mxu0 0.0
      %1004 = vmatpush2.msra.mxu0 0.0
      %1005 = vmatprep.mubr.f32.mxu0 0.0
      %1006 = vmatmul.mubr.f32.gmra.mxu0 %v862
      %v1007 = vpop.f32.mrf.mxu0
      %v1008 = vadd.f32 0.0, %v1007
      %v1009 = vpop.f32.mrf.mxu0
      %1010 = vdwg.mxu0
      %v1011 = vadd.f32 %v842, %v937
      %v1012 = vadd.f32 %v843, %v939
      %v1013 = vadd.f32 %v844, %v1008
      %v1014 = vld [vmem:[%s165] sm:$0xff]
      %v1015 = vld [vmem:[%s165 + $0x8] sm:$0xf]
      %s1016 = scalar_lea.vmem %s1, 40
      %v1017 = vld [vmem:[%s1016] sm:$0xff]
      %v1020 = vcombine.high %v1014, %v1014
      %1021 = vrot.lane.b32.xlu0 %v1014, 108
      %v1022 = vpop.permute.xlu0 %1021
      %1023 = vrot.lane.b32.xlu0 %v1020, 108
      %v1024 = vpop.permute.xlu0 %1023
      %1025 = vrot.lane.b32.xlu0 %v1015, 108
      %v1026 = vpop.permute.xlu0 %1025
      %vm1027 = vcmask 883712
      %v1028 = vsel %vm1027, %v1022, %v1024
      %v1029 = vsel %vm1027, %v1024, %v1026
      %v1031 = vsel %vm183, %v1017, 0
      %v1033 = vsel %vm187, %v1028, 0
      %v1035 = vsel %vm187, %v1029, 0
      %v1037 = vsel %vm187, %v1026, 0
      %1039 = vmatprep.subr.mxu0 0.0
      %1040 = vmatpush1.msra.mxu0 0.0
      %1041 = vmatprep.subr.mxu0 0.0
      %1042 = vmatpush1.msra.mxu0 0.0
      %1043 = vmatprep.subr.mxu0 0.0
      %1044 = vmatpush1.msra.mxu0 0.0
      %1045 = vmatprep.subr.mxu0 0.0
      %1046 = vmatpush1.msra.mxu0 0.0
      %1047 = vmatprep.subr.mxu0 0.0
      %1048 = vmatpush1.msra.mxu0 0.0
      %1049 = vmatprep.subr.mxu0 0.0
      %1050 = vmatpush1.msra.mxu0 0.0
      %1051 = vmatprep.subr.mxu0 0.0
      %1052 = vmatpush1.msra.mxu0 0.0
      %1053 = vmatprep.subr.mxu0 0.0
      %1054 = vmatpush1.msra.mxu0 0.0
      %1055 = vmatprep.subr.mxu0 0.0
      %1056 = vmatpush1.msra.mxu0 0.0
      %1057 = vmatprep.subr.mxu0 0.0
      %1058 = vmatpush1.msra.mxu0 0.0
      %1059 = vmatprep.subr.mxu0 0.0
      %1060 = vmatpush1.msra.mxu0 0.0
      %1061 = vmatprep.subr.mxu0 0.0
      %1062 = vmatpush1.msra.mxu0 0.0
      %1063 = vmatprep.subr.mxu0 0.0
      %1064 = vmatpush1.msra.mxu0 0.0
      %1065 = vmatprep.subr.mxu0 0.0
      %1066 = vmatpush1.msra.mxu0 0.0
      %1067 = vmatprep.subr.mxu0 0.0
      %1068 = vmatpush1.msra.mxu0 0.0
      %1069 = vmatprep.subr.mxu0 %v1035
      %1070 = vmatpush1.msra.mxu0 %v1033
      %1071 = vmatprep.subr.mxu0 0.0
      %1072 = vmatpush2.msra.mxu0 0.0
      %1073 = vmatprep.subr.mxu0 0.0
      %1074 = vmatpush2.msra.mxu0 0.0
      %1075 = vmatprep.subr.mxu0 0.0
      %1076 = vmatpush2.msra.mxu0 0.0
      %1077 = vmatprep.subr.mxu0 0.0
      %1078 = vmatpush2.msra.mxu0 0.0
      %1079 = vmatprep.subr.mxu0 0.0
      %1080 = vmatpush2.msra.mxu0 0.0
      %1081 = vmatprep.subr.mxu0 0.0
      %1082 = vmatpush2.msra.mxu0 0.0
      %1083 = vmatprep.subr.mxu0 0.0
      %1084 = vmatpush2.msra.mxu0 0.0
      %1085 = vmatprep.subr.mxu0 0.0
      %1086 = vmatpush2.msra.mxu0 0.0
      %1087 = vmatprep.subr.mxu0 0.0
      %1088 = vmatpush2.msra.mxu0 0.0
      %1089 = vmatprep.subr.mxu0 0.0
      %1090 = vmatpush2.msra.mxu0 0.0
      %1091 = vmatprep.subr.mxu0 0.0
      %1092 = vmatpush2.msra.mxu0 0.0
      %1093 = vmatprep.subr.mxu0 0.0
      %1094 = vmatpush2.msra.mxu0 0.0
      %1095 = vmatprep.subr.mxu0 0.0
      %1096 = vmatpush2.msra.mxu0 0.0
      %1097 = vmatprep.subr.mxu0 0.0
      %1098 = vmatpush2.msra.mxu0 0.0
      %1099 = vmatprep.subr.mxu0 0.0
      %1100 = vmatpush2.msra.mxu0 0.0
      %1101 = vmatprep.subr.mxu0 0.0
      %1102 = vmatpush2.msra.mxu0 0.0
      %1103 = vmatprep.mubr.f32.mxu0 0.0
      %1104 = vmatmul.mubr.f32.gmra.mxu0 %v1031
      %v1105 = vpop.f32.mrf.mxu0
      %v1106 = vadd.f32 0.0, %v1105
      %v1107 = vpop.f32.mrf.mxu0
      %v1108 = vadd.f32 0.0, %v1107
      %1109 = vdwg.mxu0
      %1110 = vmatprep.subr.mxu0 0.0
      %1111 = vmatpush1.msra.mxu0 0.0
      %1112 = vmatprep.subr.mxu0 0.0
      %1113 = vmatpush1.msra.mxu0 0.0
      %1114 = vmatprep.subr.mxu0 0.0
      %1115 = vmatpush1.msra.mxu0 0.0
      %1116 = vmatprep.subr.mxu0 0.0
      %1117 = vmatpush1.msra.mxu0 0.0
      %1118 = vmatprep.subr.mxu0 0.0
      %1119 = vmatpush1.msra.mxu0 0.0
      %1120 = vmatprep.subr.mxu0 0.0
      %1121 = vmatpush1.msra.mxu0 0.0
      %1122 = vmatprep.subr.mxu0 0.0
      %1123 = vmatpush1.msra.mxu0 0.0
      %1124 = vmatprep.subr.mxu0 0.0
      %1125 = vmatpush1.msra.mxu0 0.0
      %1126 = vmatprep.subr.mxu0 0.0
      %1127 = vmatpush1.msra.mxu0 0.0
      %1128 = vmatprep.subr.mxu0 0.0
      %1129 = vmatpush1.msra.mxu0 0.0
      %1130 = vmatprep.subr.mxu0 0.0
      %1131 = vmatpush1.msra.mxu0 0.0
      %1132 = vmatprep.subr.mxu0 0.0
      %1133 = vmatpush1.msra.mxu0 0.0
      %1134 = vmatprep.subr.mxu0 0.0
      %1135 = vmatpush1.msra.mxu0 0.0
      %1136 = vmatprep.subr.mxu0 0.0
      %1137 = vmatpush1.msra.mxu0 0.0
      %1138 = vmatprep.subr.mxu0 0.0
      %1139 = vmatpush1.msra.mxu0 0.0
      %1140 = vmatprep.subr.mxu0 0.0
      %1141 = vmatpush1.msra.mxu0 %v1037
      %1142 = vmatprep.subr.mxu0 0.0
      %1143 = vmatpush2.msra.mxu0 0.0
      %1144 = vmatprep.subr.mxu0 0.0
      %1145 = vmatpush2.msra.mxu0 0.0
      %1146 = vmatprep.subr.mxu0 0.0
      %1147 = vmatpush2.msra.mxu0 0.0
      %1148 = vmatprep.subr.mxu0 0.0
      %1149 = vmatpush2.msra.mxu0 0.0
      %1150 = vmatprep.subr.mxu0 0.0
      %1151 = vmatpush2.msra.mxu0 0.0
      %1152 = vmatprep.subr.mxu0 0.0
      %1153 = vmatpush2.msra.mxu0 0.0
      %1154 = vmatprep.subr.mxu0 0.0
      %1155 = vmatpush2.msra.mxu0 0.0
      %1156 = vmatprep.subr.mxu0 0.0
      %1157 = vmatpush2.msra.mxu0 0.0
      %1158 = vmatprep.subr.mxu0 0.0
      %1159 = vmatpush2.msra.mxu0 0.0
      %1160 = vmatprep.subr.mxu0 0.0
      %1161 = vmatpush2.msra.mxu0 0.0
      %1162 = vmatprep.subr.mxu0 0.0
      %1163 = vmatpush2.msra.mxu0 0.0
      %1164 = vmatprep.subr.mxu0 0.0
      %1165 = vmatpush2.msra.mxu0 0.0
      %1166 = vmatprep.subr.mxu0 0.0
      %1167 = vmatpush2.msra.mxu0 0.0
      %1168 = vmatprep.subr.mxu0 0.0
      %1169 = vmatpush2.msra.mxu0 0.0
      %1170 = vmatprep.subr.mxu0 0.0
      %1171 = vmatpush2.msra.mxu0 0.0
      %1172 = vmatprep.subr.mxu0 0.0
      %1173 = vmatpush2.msra.mxu0 0.0
      %1174 = vmatprep.mubr.f32.mxu0 0.0
      %1175 = vmatmul.mubr.f32.gmra.mxu0 %v1031
      %v1176 = vpop.f32.mrf.mxu0
      %v1177 = vadd.f32 0.0, %v1176
      %v1178 = vpop.f32.mrf.mxu0
      %1179 = vdwg.mxu0
      %v1180 = vadd.f32 %v1011, %v1106
      %v1181 = vadd.f32 %v1012, %v1108
      %v1182 = vadd.f32 %v1013, %v1177
      %v1183 = vld [vmem:[%s165] sm:$0xff]
      %v1184 = vld [vmem:[%s165 + $0x8] sm:$0xf]
      %s1185 = scalar_lea.vmem %s1, 48
      %v1186 = vld [vmem:[%s1185] sm:$0xff]
      %v1189 = vcombine.high %v1183, %v1183
      %1190 = vrot.lane.b32.xlu0 %v1183, 92
      %v1191 = vpop.permute.xlu0 %1190
      %1192 = vrot.lane.b32.xlu0 %v1189, 92
      %v1193 = vpop.permute.xlu0 %1192
      %1194 = vrot.lane.b32.xlu0 %v1184, 92
      %v1195 = vpop.permute.xlu0 %1194
      %vm1196 = vcmask 752640
      %v1197 = vsel %vm1196, %v1191, %v1193
      %v1198 = vsel %vm1196, %v1193, %v1195
      %v1200 = vsel %vm183, %v1186, 0
      %v1202 = vsel %vm187, %v1197, 0
      %v1204 = vsel %vm187, %v1198, 0
      %v1206 = vsel %vm187, %v1195, 0
      %1208 = vmatprep.subr.mxu0 0.0
      %1209 = vmatpush1.msra.mxu0 0.0
      %1210 = vmatprep.subr.mxu0 0.0
      %1211 = vmatpush1.msra.mxu0 0.0
      %1212 = vmatprep.subr.mxu0 0.0
      %1213 = vmatpush1.msra.mxu0 0.0
      %1214 = vmatprep.subr.mxu0 0.0
      %1215 = vmatpush1.msra.mxu0 0.0
      %1216 = vmatprep.subr.mxu0 0.0
      %1217 = vmatpush1.msra.mxu0 0.0
      %1218 = vmatprep.subr.mxu0 0.0
      %1219 = vmatpush1.msra.mxu0 0.0
      %1220 = vmatprep.subr.mxu0 0.0
      %1221 = vmatpush1.msra.mxu0 0.0
      %1222 = vmatprep.subr.mxu0 0.0
      %1223 = vmatpush1.msra.mxu0 0.0
      %1224 = vmatprep.subr.mxu0 0.0
      %1225 = vmatpush1.msra.mxu0 0.0
      %1226 = vmatprep.subr.mxu0 0.0
      %1227 = vmatpush1.msra.mxu0 0.0
      %1228 = vmatprep.subr.mxu0 0.0
      %1229 = vmatpush1.msra.mxu0 0.0
      %1230 = vmatprep.subr.mxu0 0.0
      %1231 = vmatpush1.msra.mxu0 0.0
      %1232 = vmatprep.subr.mxu0 0.0
      %1233 = vmatpush1.msra.mxu0 0.0
      %1234 = vmatprep.subr.mxu0 0.0
      %1235 = vmatpush1.msra.mxu0 0.0
      %1236 = vmatprep.subr.mxu0 0.0
      %1237 = vmatpush1.msra.mxu0 0.0
      %1238 = vmatprep.subr.mxu0 %v1204
      %1239 = vmatpush1.msra.mxu0 %v1202
      %1240 = vmatprep.subr.mxu0 0.0
      %1241 = vmatpush2.msra.mxu0 0.0
      %1242 = vmatprep.subr.mxu0 0.0
      %1243 = vmatpush2.msra.mxu0 0.0
      %1244 = vmatprep.subr.mxu0 0.0
      %1245 = vmatpush2.msra.mxu0 0.0
      %1246 = vmatprep.subr.mxu0 0.0
      %1247 = vmatpush2.msra.mxu0 0.0
      %1248 = vmatprep.subr.mxu0 0.0
      %1249 = vmatpush2.msra.mxu0 0.0
      %1250 = vmatprep.subr.mxu0 0.0
      %1251 = vmatpush2.msra.mxu0 0.0
      %1252 = vmatprep.subr.mxu0 0.0
      %1253 = vmatpush2.msra.mxu0 0.0
      %1254 = vmatprep.subr.mxu0 0.0
      %1255 = vmatpush2.msra.mxu0 0.0
      %1256 = vmatprep.subr.mxu0 0.0
      %1257 = vmatpush2.msra.mxu0 0.0
      %1258 = vmatprep.subr.mxu0 0.0
      %1259 = vmatpush2.msra.mxu0 0.0
      %1260 = vmatprep.subr.mxu0 0.0
      %1261 = vmatpush2.msra.mxu0 0.0
      %1262 = vmatprep.subr.mxu0 0.0
      %1263 = vmatpush2.msra.mxu0 0.0
      %1264 = vmatprep.subr.mxu0 0.0
      %1265 = vmatpush2.msra.mxu0 0.0
      %1266 = vmatprep.subr.mxu0 0.0
      %1267 = vmatpush2.msra.mxu0 0.0
      %1268 = vmatprep.subr.mxu0 0.0
      %1269 = vmatpush2.msra.mxu0 0.0
      %1270 = vmatprep.subr.mxu0 0.0
      %1271 = vmatpush2.msra.mxu0 0.0
      %1272 = vmatprep.mubr.f32.mxu0 0.0
      %1273 = vmatmul.mubr.f32.gmra.mxu0 %v1200
      %v1274 = vpop.f32.mrf.mxu0
      %v1275 = vadd.f32 0.0, %v1274
      %v1276 = vpop.f32.mrf.mxu0
      %v1277 = vadd.f32 0.0, %v1276
      %1278 = vdwg.mxu0
      %1279 = vmatprep.subr.mxu0 0.0
      %1280 = vmatpush1.msra.mxu0 0.0
      %1281 = vmatprep.subr.mxu0 0.0
      %1282 = vmatpush1.msra.mxu0 0.0
      %1283 = vmatprep.subr.mxu0 0.0
      %1284 = vmatpush1.msra.mxu0 0.0
      %1285 = vmatprep.subr.mxu0 0.0
      %1286 = vmatpush1.msra.mxu0 0.0
      %1287 = vmatprep.subr.mxu0 0.0
      %1288 = vmatpush1.msra.mxu0 0.0
      %1289 = vmatprep.subr.mxu0 0.0
      %1290 = vmatpush1.msra.mxu0 0.0
      %1291 = vmatprep.subr.mxu0 0.0
      %1292 = vmatpush1.msra.mxu0 0.0
      %1293 = vmatprep.subr.mxu0 0.0
      %1294 = vmatpush1.msra.mxu0 0.0
      %1295 = vmatprep.subr.mxu0 0.0
      %1296 = vmatpush1.msra.mxu0 0.0
      %1297 = vmatprep.subr.mxu0 0.0
      %1298 = vmatpush1.msra.mxu0 0.0
      %1299 = vmatprep.subr.mxu0 0.0
      %1300 = vmatpush1.msra.mxu0 0.0
      %1301 = vmatprep.subr.mxu0 0.0
      %1302 = vmatpush1.msra.mxu0 0.0
      %1303 = vmatprep.subr.mxu0 0.0
      %1304 = vmatpush1.msra.mxu0 0.0
      %1305 = vmatprep.subr.mxu0 0.0
      %1306 = vmatpush1.msra.mxu0 0.0
      %1307 = vmatprep.subr.mxu0 0.0
      %1308 = vmatpush1.msra.mxu0 0.0
      %1309 = vmatprep.subr.mxu0 0.0
      %1310 = vmatpush1.msra.mxu0 %v1206
      %1311 = vmatprep.subr.mxu0 0.0
      %1312 = vmatpush2.msra.mxu0 0.0
      %1313 = vmatprep.subr.mxu0 0.0
      %1314 = vmatpush2.msra.mxu0 0.0
      %1315 = vmatprep.subr.mxu0 0.0
      %1316 = vmatpush2.msra.mxu0 0.0
      %1317 = vmatprep.subr.mxu0 0.0
      %1318 = vmatpush2.msra.mxu0 0.0
      %1319 = vmatprep.subr.mxu0 0.0
      %1320 = vmatpush2.msra.mxu0 0.0
      %1321 = vmatprep.subr.mxu0 0.0
      %1322 = vmatpush2.msra.mxu0 0.0
      %1323 = vmatprep.subr.mxu0 0.0
      %1324 = vmatpush2.msra.mxu0 0.0
      %1325 = vmatprep.subr.mxu0 0.0
      %1326 = vmatpush2.msra.mxu0 0.0
      %1327 = vmatprep.subr.mxu0 0.0
      %1328 = vmatpush2.msra.mxu0 0.0
      %1329 = vmatprep.subr.mxu0 0.0
      %1330 = vmatpush2.msra.mxu0 0.0
      %1331 = vmatprep.subr.mxu0 0.0
      %1332 = vmatpush2.msra.mxu0 0.0
      %1333 = vmatprep.subr.mxu0 0.0
      %1334 = vmatpush2.msra.mxu0 0.0
      %1335 = vmatprep.subr.mxu0 0.0
      %1336 = vmatpush2.msra.mxu0 0.0
      %1337 = vmatprep.subr.mxu0 0.0
      %1338 = vmatpush2.msra.mxu0 0.0
      %1339 = vmatprep.subr.mxu0 0.0
      %1340 = vmatpush2.msra.mxu0 0.0
      %1341 = vmatprep.subr.mxu0 0.0
      %1342 = vmatpush2.msra.mxu0 0.0
      %1343 = vmatprep.mubr.f32.mxu0 0.0
      %1344 = vmatmul.mubr.f32.gmra.mxu0 %v1200
      %v1345 = vpop.f32.mrf.mxu0
      %v1346 = vadd.f32 0.0, %v1345
      %v1347 = vpop.f32.mrf.mxu0
      %1348 = vdwg.mxu0
      %v1349 = vadd.f32 %v1180, %v1275
      %v1350 = vadd.f32 %v1181, %v1277
      %v1351 = vadd.f32 %v1182, %v1346
      %v1352 = vld [vmem:[%s165] sm:$0xff]
      %v1353 = vld [vmem:[%s165 + $0x8] sm:$0xf]
      %s1354 = scalar_lea.vmem %s1, 56
      %v1355 = vld [vmem:[%s1354] sm:$0xff]
      %v1358 = vcombine.high %v1352, %v1352
      %1359 = vrot.lane.b32.xlu0 %v1352, 91
      %v1360 = vpop.permute.xlu0 %1359
      %1361 = vrot.lane.b32.xlu0 %v1358, 91
      %v1362 = vpop.permute.xlu0 %1361
      %1363 = vrot.lane.b32.xlu0 %v1353, 91
      %v1364 = vpop.permute.xlu0 %1363
      %vm1365 = vcmask 744448
      %v1366 = vsel %vm1365, %v1360, %v1362
      %v1367 = vsel %vm1365, %v1362, %v1364
      %v1369 = vsel %vm183, %v1355, 0
      %v1371 = vsel %vm187, %v1366, 0
      %v1373 = vsel %vm187, %v1367, 0
      %v1375 = vsel %vm187, %v1364, 0
      %1377 = vmatprep.subr.mxu0 0.0
      %1378 = vmatpush1.msra.mxu0 0.0
      %1379 = vmatprep.subr.mxu0 0.0
      %1380 = vmatpush1.msra.mxu0 0.0
      %1381 = vmatprep.subr.mxu0 0.0
      %1382 = vmatpush1.msra.mxu0 0.0
      %1383 = vmatprep.subr.mxu0 0.0
      %1384 = vmatpush1.msra.mxu0 0.0
      %1385 = vmatprep.subr.mxu0 0.0
      %1386 = vmatpush1.msra.mxu0 0.0
      %1387 = vmatprep.subr.mxu0 0.0
      %1388 = vmatpush1.msra.mxu0 0.0
      %1389 = vmatprep.subr.mxu0 0.0
      %1390 = vmatpush1.msra.mxu0 0.0
      %1391 = vmatprep.subr.mxu0 0.0
      %1392 = vmatpush1.msra.mxu0 0.0
      %1393 = vmatprep.subr.mxu0 0.0
      %1394 = vmatpush1.msra.mxu0 0.0
      %1395 = vmatprep.subr.mxu0 0.0
      %1396 = vmatpush1.msra.mxu0 0.0
      %1397 = vmatprep.subr.mxu0 0.0
      %1398 = vmatpush1.msra.mxu0 0.0
      %1399 = vmatprep.subr.mxu0 0.0
      %1400 = vmatpush1.msra.mxu0 0.0
      %1401 = vmatprep.subr.mxu0 0.0
      %1402 = vmatpush1.msra.mxu0 0.0
      %1403 = vmatprep.subr.mxu0 0.0
      %1404 = vmatpush1.msra.mxu0 0.0
      %1405 = vmatprep.subr.mxu0 0.0
      %1406 = vmatpush1.msra.mxu0 0.0
      %1407 = vmatprep.subr.mxu0 %v1373
      %1408 = vmatpush1.msra.mxu0 %v1371
      %1409 = vmatprep.subr.mxu0 0.0
      %1410 = vmatpush2.msra.mxu0 0.0
      %1411 = vmatprep.subr.mxu0 0.0
      %1412 = vmatpush2.msra.mxu0 0.0
      %1413 = vmatprep.subr.mxu0 0.0
      %1414 = vmatpush2.msra.mxu0 0.0
      %1415 = vmatprep.subr.mxu0 0.0
      %1416 = vmatpush2.msra.mxu0 0.0
      %1417 = vmatprep.subr.mxu0 0.0
      %1418 = vmatpush2.msra.mxu0 0.0
      %1419 = vmatprep.subr.mxu0 0.0
      %1420 = vmatpush2.msra.mxu0 0.0
      %1421 = vmatprep.subr.mxu0 0.0
      %1422 = vmatpush2.msra.mxu0 0.0
      %1423 = vmatprep.subr.mxu0 0.0
      %1424 = vmatpush2.msra.mxu0 0.0
      %1425 = vmatprep.subr.mxu0 0.0
      %1426 = vmatpush2.msra.mxu0 0.0
      %1427 = vmatprep.subr.mxu0 0.0
      %1428 = vmatpush2.msra.mxu0 0.0
      %1429 = vmatprep.subr.mxu0 0.0
      %1430 = vmatpush2.msra.mxu0 0.0
      %1431 = vmatprep.subr.mxu0 0.0
      %1432 = vmatpush2.msra.mxu0 0.0
      %1433 = vmatprep.subr.mxu0 0.0
      %1434 = vmatpush2.msra.mxu0 0.0
      %1435 = vmatprep.subr.mxu0 0.0
      %1436 = vmatpush2.msra.mxu0 0.0
      %1437 = vmatprep.subr.mxu0 0.0
      %1438 = vmatpush2.msra.mxu0 0.0
      %1439 = vmatprep.subr.mxu0 0.0
      %1440 = vmatpush2.msra.mxu0 0.0
      %1441 = vmatprep.mubr.f32.mxu0 0.0
      %1442 = vmatmul.mubr.f32.gmra.mxu0 %v1369
      %v1443 = vpop.f32.mrf.mxu0
      %v1444 = vadd.f32 0.0, %v1443
      %v1445 = vpop.f32.mrf.mxu0
      %v1446 = vadd.f32 0.0, %v1445
      %1447 = vdwg.mxu0
      %1448 = vmatprep.subr.mxu0 0.0
      %1449 = vmatpush1.msra.mxu0 0.0
      %1450 = vmatprep.subr.mxu0 0.0
      %1451 = vmatpush1.msra.mxu0 0.0
      %1452 = vmatprep.subr.mxu0 0.0
      %1453 = vmatpush1.msra.mxu0 0.0
      %1454 = vmatprep.subr.mxu0 0.0
      %1455 = vmatpush1.msra.mxu0 0.0
      %1456 = vmatprep.subr.mxu0 0.0
      %1457 = vmatpush1.msra.mxu0 0.0
      %1458 = vmatprep.subr.mxu0 0.0
      %1459 = vmatpush1.msra.mxu0 0.0
      %1460 = vmatprep.subr.mxu0 0.0
      %1461 = vmatpush1.msra.mxu0 0.0
      %1462 = vmatprep.subr.mxu0 0.0
      %1463 = vmatpush1.msra.mxu0 0.0
      %1464 = vmatprep.subr.mxu0 0.0
      %1465 = vmatpush1.msra.mxu0 0.0
      %1466 = vmatprep.subr.mxu0 0.0
      %1467 = vmatpush1.msra.mxu0 0.0
      %1468 = vmatprep.subr.mxu0 0.0
      %1469 = vmatpush1.msra.mxu0 0.0
      %1470 = vmatprep.subr.mxu0 0.0
      %1471 = vmatpush1.msra.mxu0 0.0
      %1472 = vmatprep.subr.mxu0 0.0
      %1473 = vmatpush1.msra.mxu0 0.0
      %1474 = vmatprep.subr.mxu0 0.0
      %1475 = vmatpush1.msra.mxu0 0.0
      %1476 = vmatprep.subr.mxu0 0.0
      %1477 = vmatpush1.msra.mxu0 0.0
      %1478 = vmatprep.subr.mxu0 0.0
      %1479 = vmatpush1.msra.mxu0 %v1375
      %1480 = vmatprep.subr.mxu0 0.0
      %1481 = vmatpush2.msra.mxu0 0.0
      %1482 = vmatprep.subr.mxu0 0.0
      %1483 = vmatpush2.msra.mxu0 0.0
      %1484 = vmatprep.subr.mxu0 0.0
      %1485 = vmatpush2.msra.mxu0 0.0
      %1486 = vmatprep.subr.mxu0 0.0
      %1487 = vmatpush2.msra.mxu0 0.0
      %1488 = vmatprep.subr.mxu0 0.0
      %1489 = vmatpush2.msra.mxu0 0.0
      %1490 = vmatprep.subr.mxu0 0.0
      %1491 = vmatpush2.msra.mxu0 0.0
      %1492 = vmatprep.subr.mxu0 0.0
      %1493 = vmatpush2.msra.mxu0 0.0
      %1494 = vmatprep.subr.mxu0 0.0
      %1495 = vmatpush2.msra.mxu0 0.0
      %1496 = vmatprep.subr.mxu0 0.0
      %1497 = vmatpush2.msra.mxu0 0.0
      %1498 = vmatprep.subr.mxu0 0.0
      %1499 = vmatpush2.msra.mxu0 0.0
      %1500 = vmatprep.subr.mxu0 0.0
      %1501 = vmatpush2.msra.mxu0 0.0
      %1502 = vmatprep.subr.mxu0 0.0
      %1503 = vmatpush2.msra.mxu0 0.0
      %1504 = vmatprep.subr.mxu0 0.0
      %1505 = vmatpush2.msra.mxu0 0.0
      %1506 = vmatprep.subr.mxu0 0.0
      %1507 = vmatpush2.msra.mxu0 0.0
      %1508 = vmatprep.subr.mxu0 0.0
      %1509 = vmatpush2.msra.mxu0 0.0
      %1510 = vmatprep.subr.mxu0 0.0
      %1511 = vmatpush2.msra.mxu0 0.0
      %1512 = vmatprep.mubr.f32.mxu0 0.0
      %1513 = vmatmul.mubr.f32.gmra.mxu0 %v1369
      %v1514 = vpop.f32.mrf.mxu0
      %v1515 = vadd.f32 0.0, %v1514
      %v1516 = vpop.f32.mrf.mxu0
      %1517 = vdwg.mxu0
      %v1518 = vadd.f32 %v1349, %v1444
      %v1519 = vadd.f32 %v1350, %v1446
      %v1520 = vadd.f32 %v1351, %v1515
      %v1521 = vld [vmem:[%s165] sm:$0xff]
      %v1522 = vld [vmem:[%s165 + $0x8] sm:$0xf]
      %s1523 = scalar_lea.vmem %s1, 64
      %v1524 = vld [vmem:[%s1523] sm:$0xff]
      %v1527 = vcombine.high %v1521, %v1521
      %1528 = vrot.lane.b32.xlu0 %v1521, 90
      %v1529 = vpop.permute.xlu0 %1528
      %1530 = vrot.lane.b32.xlu0 %v1527, 90
      %v1531 = vpop.permute.xlu0 %1530
      %1532 = vrot.lane.b32.xlu0 %v1522, 90
      %v1533 = vpop.permute.xlu0 %1532
      %vm1534 = vcmask 736256
      %v1535 = vsel %vm1534, %v1529, %v1531
      %v1536 = vsel %vm1534, %v1531, %v1533
      %v1538 = vsel %vm183, %v1524, 0
      %v1540 = vsel %vm187, %v1535, 0
      %v1542 = vsel %vm187, %v1536, 0
      %v1544 = vsel %vm187, %v1533, 0
      %1546 = vmatprep.subr.mxu0 0.0
      %1547 = vmatpush1.msra.mxu0 0.0
      %1548 = vmatprep.subr.mxu0 0.0
      %1549 = vmatpush1.msra.mxu0 0.0
      %1550 = vmatprep.subr.mxu0 0.0
      %1551 = vmatpush1.msra.mxu0 0.0
      %1552 = vmatprep.subr.mxu0 0.0
      %1553 = vmatpush1.msra.mxu0 0.0
      %1554 = vmatprep.subr.mxu0 0.0
      %1555 = vmatpush1.msra.mxu0 0.0
      %1556 = vmatprep.subr.mxu0 0.0
      %1557 = vmatpush1.msra.mxu0 0.0
      %1558 = vmatprep.subr.mxu0 0.0
      %1559 = vmatpush1.msra.mxu0 0.0
      %1560 = vmatprep.subr.mxu0 0.0
      %1561 = vmatpush1.msra.mxu0 0.0
      %1562 = vmatprep.subr.mxu0 0.0
      %1563 = vmatpush1.msra.mxu0 0.0
      %1564 = vmatprep.subr.mxu0 0.0
      %1565 = vmatpush1.msra.mxu0 0.0
      %1566 = vmatprep.subr.mxu0 0.0
      %1567 = vmatpush1.msra.mxu0 0.0
      %1568 = vmatprep.subr.mxu0 0.0
      %1569 = vmatpush1.msra.mxu0 0.0
      %1570 = vmatprep.subr.mxu0 0.0
      %1571 = vmatpush1.msra.mxu0 0.0
      %1572 = vmatprep.subr.mxu0 0.0
      %1573 = vmatpush1.msra.mxu0 0.0
      %1574 = vmatprep.subr.mxu0 0.0
      %1575 = vmatpush1.msra.mxu0 0.0
      %1576 = vmatprep.subr.mxu0 %v1542
      %1577 = vmatpush1.msra.mxu0 %v1540
      %1578 = vmatprep.subr.mxu0 0.0
      %1579 = vmatpush2.msra.mxu0 0.0
      %1580 = vmatprep.subr.mxu0 0.0
      %1581 = vmatpush2.msra.mxu0 0.0
      %1582 = vmatprep.subr.mxu0 0.0
      %1583 = vmatpush2.msra.mxu0 0.0
      %1584 = vmatprep.subr.mxu0 0.0
      %1585 = vmatpush2.msra.mxu0 0.0
      %1586 = vmatprep.subr.mxu0 0.0
      %1587 = vmatpush2.msra.mxu0 0.0
      %1588 = vmatprep.subr.mxu0 0.0
      %1589 = vmatpush2.msra.mxu0 0.0
      %1590 = vmatprep.subr.mxu0 0.0
      %1591 = vmatpush2.msra.mxu0 0.0
      %1592 = vmatprep.subr.mxu0 0.0
      %1593 = vmatpush2.msra.mxu0 0.0
      %1594 = vmatprep.subr.mxu0 0.0
      %1595 = vmatpush2.msra.mxu0 0.0
      %1596 = vmatprep.subr.mxu0 0.0
      %1597 = vmatpush2.msra.mxu0 0.0
      %1598 = vmatprep.subr.mxu0 0.0
      %1599 = vmatpush2.msra.mxu0 0.0
      %1600 = vmatprep.subr.mxu0 0.0
      %1601 = vmatpush2.msra.mxu0 0.0
      %1602 = vmatprep.subr.mxu0 0.0
      %1603 = vmatpush2.msra.mxu0 0.0
      %1604 = vmatprep.subr.mxu0 0.0
      %1605 = vmatpush2.msra.mxu0 0.0
      %1606 = vmatprep.subr.mxu0 0.0
      %1607 = vmatpush2.msra.mxu0 0.0
      %1608 = vmatprep.subr.mxu0 0.0
      %1609 = vmatpush2.msra.mxu0 0.0
      %1610 = vmatprep.mubr.f32.mxu0 0.0
      %1611 = vmatmul.mubr.f32.gmra.mxu0 %v1538
      %v1612 = vpop.f32.mrf.mxu0
      %v1613 = vadd.f32 0.0, %v1612
      %v1614 = vpop.f32.mrf.mxu0
      %v1615 = vadd.f32 0.0, %v1614
      %1616 = vdwg.mxu0
      %1617 = vmatprep.subr.mxu0 0.0
      %1618 = vmatpush1.msra.mxu0 0.0
      %1619 = vmatprep.subr.mxu0 0.0
      %1620 = vmatpush1.msra.mxu0 0.0
      %1621 = vmatprep.subr.mxu0 0.0
      %1622 = vmatpush1.msra.mxu0 0.0
      %1623 = vmatprep.subr.mxu0 0.0
      %1624 = vmatpush1.msra.mxu0 0.0
      %1625 = vmatprep.subr.mxu0 0.0
      %1626 = vmatpush1.msra.mxu0 0.0
      %1627 = vmatprep.subr.mxu0 0.0
      %1628 = vmatpush1.msra.mxu0 0.0
      %1629 = vmatprep.subr.mxu0 0.0
      %1630 = vmatpush1.msra.mxu0 0.0
      %1631 = vmatprep.subr.mxu0 0.0
      %1632 = vmatpush1.msra.mxu0 0.0
      %1633 = vmatprep.subr.mxu0 0.0
      %1634 = vmatpush1.msra.mxu0 0.0
      %1635 = vmatprep.subr.mxu0 0.0
      %1636 = vmatpush1.msra.mxu0 0.0
      %1637 = vmatprep.subr.mxu0 0.0
      %1638 = vmatpush1.msra.mxu0 0.0
      %1639 = vmatprep.subr.mxu0 0.0
      %1640 = vmatpush1.msra.mxu0 0.0
      %1641 = vmatprep.subr.mxu0 0.0
      %1642 = vmatpush1.msra.mxu0 0.0
      %1643 = vmatprep.subr.mxu0 0.0
      %1644 = vmatpush1.msra.mxu0 0.0
      %1645 = vmatprep.subr.mxu0 0.0
      %1646 = vmatpush1.msra.mxu0 0.0
      %1647 = vmatprep.subr.mxu0 0.0
      %1648 = vmatpush1.msra.mxu0 %v1544
      %1649 = vmatprep.subr.mxu0 0.0
      %1650 = vmatpush2.msra.mxu0 0.0
      %1651 = vmatprep.subr.mxu0 0.0
      %1652 = vmatpush2.msra.mxu0 0.0
      %1653 = vmatprep.subr.mxu0 0.0
      %1654 = vmatpush2.msra.mxu0 0.0
      %1655 = vmatprep.subr.mxu0 0.0
      %1656 = vmatpush2.msra.mxu0 0.0
      %1657 = vmatprep.subr.mxu0 0.0
      %1658 = vmatpush2.msra.mxu0 0.0
      %1659 = vmatprep.subr.mxu0 0.0
      %1660 = vmatpush2.msra.mxu0 0.0
      %1661 = vmatprep.subr.mxu0 0.0
      %1662 = vmatpush2.msra.mxu0 0.0
      %1663 = vmatprep.subr.mxu0 0.0
      %1664 = vmatpush2.msra.mxu0 0.0
      %1665 = vmatprep.subr.mxu0 0.0
      %1666 = vmatpush2.msra.mxu0 0.0
      %1667 = vmatprep.subr.mxu0 0.0
      %1668 = vmatpush2.msra.mxu0 0.0
      %1669 = vmatprep.subr.mxu0 0.0
      %1670 = vmatpush2.msra.mxu0 0.0
      %1671 = vmatprep.subr.mxu0 0.0
      %1672 = vmatpush2.msra.mxu0 0.0
      %1673 = vmatprep.subr.mxu0 0.0
      %1674 = vmatpush2.msra.mxu0 0.0
      %1675 = vmatprep.subr.mxu0 0.0
      %1676 = vmatpush2.msra.mxu0 0.0
      %1677 = vmatprep.subr.mxu0 0.0
      %1678 = vmatpush2.msra.mxu0 0.0
      %1679 = vmatprep.subr.mxu0 0.0
      %1680 = vmatpush2.msra.mxu0 0.0
      %1681 = vmatprep.mubr.f32.mxu0 0.0
      %1682 = vmatmul.mubr.f32.gmra.mxu0 %v1538
      %v1683 = vpop.f32.mrf.mxu0
      %v1684 = vadd.f32 0.0, %v1683
      %v1685 = vpop.f32.mrf.mxu0
      %1686 = vdwg.mxu0
      %v1687 = vadd.f32 %v1518, %v1613
      %v1688 = vadd.f32 %v1519, %v1615
      %v1689 = vadd.f32 %v1520, %v1684
      %1690 = vst [vmem:[%s170] sm:$0xff] %v1687
      %1691 = vst [vmem:[%s170 + $0x8] sm:$0xff] %v1688
      %vm1692 = vcmask 261120
      %1693 = vst.msk [vmem:[%s170 + $0x10] sm:$0xff] %vm1692, %v1689
      %p1694 = scmp.lt.s32.totalorder %s14, 1
      %s1695 = scalar_select %p1694, %s14, 1
      %s1696 = smul.addr %s1695, 3
      %s1697 = smul.addr %s1696, 8
      %s1698 = scalar_lea.vmem %s3, %s1697
      // Predicated region
      $region33: #{relu_conv_forward.1} parent=31 // pred_check
        %p1699 = pneg %p100
      $region34: #{relu_conv_forward.1} parent=31 // pred_check_branch
        %1701 = sbr.rel (%p1699) target = $region36
      $region35: #{relu_conv_forward.1} parent=31 // pred_region
        _
      $region36: #{relu_conv_forward.1} parent=31 // pred_fallthru
        _
    $region32: #{relu_conv_forward.1} parent=5 // pred_fallthru
      _
    %p1702 = scmp.le.s32.totalorder 2, %s9
    // Predicated region
    $region37: #{relu_conv_forward.1} parent=5 // pred_check
      %p1703 = pneg %p1702
    $region38: #{relu_conv_forward.1} parent=5 // pred_check_branch
      %1705 = sbr.rel (%p1703) target = $region40
    $region39: #{relu_conv_forward.1} parent=5 // pred_region
      %s1706 = ssub.s32 %s9, 2
      // Predicated region
      $region41: #{relu_conv_forward.1} parent=39 // pred_check
        %p1707 = pneg %p106
      $region42: #{relu_conv_forward.1} parent=39 // pred_check_branch
        %1709 = sbr.rel (%p1707) target = $region44
      $region43: #{relu_conv_forward.1} parent=39 // pred_region
        %p1710 = scmp.lt.s32.totalorder %s15, 1
        %s1711 = scalar_select %p1710, %s15, 1
        %s1712 = smul.addr %s1711, 3
        %s1713 = smul.addr %s1712, 8
        %s1714 = scalar_lea.vmem %s3, %s1713
      $region44: #{relu_conv_forward.1} parent=39 // pred_fallthru
        _
    $region40: #{relu_conv_forward.1} parent=5 // pred_fallthru
      _
  $region6: #{relu_conv_forward.1} parent=0 // loop_footer
    %s13 = sadd.s32 1, %s9
  $region7: #{relu_conv_forward.1} parent=0 // loop_footer_branch
    %8 = sbr.rel target = $region3
  $region8: #{relu_conv_forward.1} parent=0 // loop_exit
    _

</llo_original>
